<compile_context>
chip_gen: v7x
topology: tpu7x:2x2x1
jax: 0.10.0
libtpu: 0.0.40
codegen_flags: <defaults>
</compile_context>

<pallas_src>
import functools

import jax
import jax.numpy as jnp
import numpy as np
from jax.experimental import pallas as pl
from jax.experimental.pallas import tpu as pltpu


def _round_up(x, m):
    return ((x + m - 1) // m) * m


# ----------------------------- Pallas kernel --------------------------------
def _lstm_fc_kernel(tok_ref,      # (T*B, 1)    i32  time-major token ids
                    embp_ref,     # (Vp, 4*Hp)  bf16 embedding_table @ W_ih
                    w_hh_ref,     # (Hp, 4*Hp)  bf16
                    b_ref,        # (1, 4*Hp)   f32  b_ih + b_hh (padded)
                    h0_ref,       # (B, Hp)     f32
                    c0_ref,       # (B, Hp)     f32
                    w_fc_ref,     # (1, Hp)     f32  fc weight row (padded)
                    b_fc_ref,     # (1,)        f32  SMEM scalar
                    sig_ref,      # (B, 1)      f32  out: sigmoid(fc(h_T))
                    hn_ref,       # (B, Hp)     f32  out: final hidden state
                    cn_ref,       # (B, Hp)     f32  out: final cell state
                    xw_ref,       # (T*B, 4*Hp) f32  VMEM scratch
                    *, hidden_pad, seq_len, batch, vocab_pad):
    Hp, T, B, Vp = hidden_pad, seq_len, batch, vocab_pad
    TB = T * B

    # Fused embedding lookup + input projection, one MXU pass for ALL steps:
    #   one_hot(tokens) @ (table @ W_ih)  ==  table[tokens] @ W_ih
    vocab_iota = jax.lax.broadcasted_iota(jnp.int32, (TB, Vp), 1)
    onehot = (vocab_iota == tok_ref[...]).astype(jnp.bfloat16)       # (TB, Vp)
    xw_ref[...] = jnp.dot(onehot, embp_ref[...],
                          preferred_element_type=jnp.float32) + b_ref[...]

    h = h0_ref[...]          # f32
    c = c0_ref[...]          # f32
    H3 = 3 * Hp

    # Fully unrolled recurrence (T is small & static). Only the active
    # (B, 4*Hp) slice of xw is loaded per step; W_hh is read from its ref.
    for t in range(T):
        gates = xw_ref[t * B:(t + 1) * B, :] + jnp.dot(
            h.astype(jnp.bfloat16), w_hh_ref[...],
            preferred_element_type=jnp.float32)                      # (B, 4Hp)
        # Gate order (i, f, o, g): one contiguous sigmoid block + one tanh.
        sig_g = jax.nn.sigmoid(gates[:, :H3])
        g_g = jnp.tanh(gates[:, H3:])
        i_g = sig_g[:, 0 * Hp:1 * Hp]
        f_g = sig_g[:, 1 * Hp:2 * Hp]
        o_g = sig_g[:, 2 * Hp:3 * Hp]
        c = f_g * c + i_g * g_g
        h = o_g * jnp.tanh(c)

    hn_ref[...] = h
    cn_ref[...] = c

    # FC head: VPU multiply + lane reduce (not an N=1 MXU pass).
    logit = jnp.sum(h * w_fc_ref[...], axis=-1, keepdims=True) + b_fc_ref[0]
    sig_ref[...] = jax.nn.sigmoid(logit)


# ------------------------- one-time weight prep -------------------------------
def prepare_params(params):
    """Pad / reorder / cast weights ONCE at model load (not per forward)."""
    V, E = params["embedding"].shape
    H = params["w_hh"].shape[0]
    Hp = max(128, _round_up(H, 128))
    Vp = max(128, _round_up(V, 128))

    def prep_gates(w):
        # (..., 4*H) in PyTorch order (i,f,g,o) -> (..., 4*Hp) in (i,f,o,g),
        # each gate block zero-padded to Hp columns.
        lead = w.shape[:-1]
        w4 = w.reshape(lead + (4, H))
        w4 = w4[..., (0, 1, 3, 2), :]
        w4 = jnp.pad(w4, [(0, 0)] * len(lead) + [(0, 0), (0, Hp - H)])
        return w4.reshape(lead + (4 * Hp,))

    w_ih = prep_gates(params["w_ih"])                              # (E, 4Hp) f32
    # Fuse embedding lookup with the input projection (precomputed once).
    emb_proj = params["embedding"].astype(jnp.float32) @ w_ih      # (V, 4Hp)
    emb_proj = jnp.pad(emb_proj, ((0, Vp - V), (0, 0))).astype(jnp.bfloat16)

    w_hh = jnp.pad(params["w_hh"], ((0, Hp - H), (0, 0)))
    w_hh = prep_gates(w_hh).astype(jnp.bfloat16)                   # (Hp, 4Hp)
    bias = prep_gates(params["b_ih"] + params["b_hh"])
    bias = bias.reshape(1, 4 * Hp).astype(jnp.float32)
    w_fc = jnp.pad(params["w_fc"].reshape(1, H), ((0, 0), (0, Hp - H)))
    w_fc = w_fc.astype(jnp.float32)
    b_fc = params["b_fc"].reshape(1).astype(jnp.float32)

    return {"emb_proj": emb_proj, "w_hh": w_hh, "bias": bias,
            "w_fc": w_fc, "b_fc": b_fc}


# ------------------------------ forward --------------------------------------
def my_model_forward(tokens, hidden, prepped):
    """tokens: (B, T) int32; hidden: (h0, c0), each (B, H); prepped: arrays
    from prepare_params.  Returns (sig_out (B,), (h_n, c_n))."""
    h0, c0 = hidden
    B, T = tokens.shape
    H = h0.shape[-1]
    Hp = prepped["w_hh"].shape[0]
    Vp = prepped["emb_proj"].shape[0]

    # Time-major flattened token ids (tiny int32 array).
    tok_tm = tokens.T.reshape(T * B, 1).astype(jnp.int32)
    h0p = jnp.pad(h0.astype(jnp.float32), ((0, 0), (0, Hp - H)))
    c0p = jnp.pad(c0.astype(jnp.float32), ((0, 0), (0, Hp - H)))

    kernel = functools.partial(_lstm_fc_kernel, hidden_pad=Hp, seq_len=T,
                               batch=B, vocab_pad=Vp)

    full = lambda shape: pl.BlockSpec(shape, lambda: (0,) * len(shape))
    smem = pl.BlockSpec(memory_space=pltpu.MemorySpace.SMEM)

    sig, h_n, c_n = pl.pallas_call(
        kernel,
        out_shape=(
            jax.ShapeDtypeStruct((B, 1), jnp.float32),
            jax.ShapeDtypeStruct((B, Hp), jnp.float32),
            jax.ShapeDtypeStruct((B, Hp), jnp.float32),
        ),
        in_specs=[
            full((T * B, 1)),        # token ids
            full((Vp, 4 * Hp)),      # emb_proj
            full((Hp, 4 * Hp)),      # w_hh
            full((1, 4 * Hp)),       # bias
            full((B, Hp)),           # h0
            full((B, Hp)),           # c0
            full((1, Hp)),           # w_fc row
            smem,                    # b_fc scalar
        ],
        out_specs=(
            full((B, 1)),
            full((B, Hp)),
            full((B, Hp)),
        ),
        scratch_shapes=[pltpu.VMEM((T * B, 4 * Hp), jnp.float32)],
    )(tok_tm, prepped["emb_proj"], prepped["w_hh"], prepped["bias"],
      h0p, c0p, prepped["w_fc"], prepped["b_fc"])

    sig_out = sig.reshape(B)                     # == sig_out[:, -1]
    return sig_out, (h_n[:, :H], c_n[:, :H])


# ------------------------- pure-JAX reference --------------------------------
def _reference_forward(tokens, hidden, params):
    h, c = hidden
    H = h.shape[-1]
    W_ih, W_hh = params["w_ih"], params["w_hh"]
    b = params["b_ih"] + params["b_hh"]
    embeds = params["embedding"][tokens]                     # (B, T, E) f32
    for t in range(tokens.shape[1]):
        g = embeds[:, t] @ W_ih + h @ W_hh + b
        i = jax.nn.sigmoid(g[:, 0 * H:1 * H])
        f = jax.nn.sigmoid(g[:, 1 * H:2 * H])
        gg = jnp.tanh(g[:, 2 * H:3 * H])
        o = jax.nn.sigmoid(g[:, 3 * H:4 * H])
        c = f * c + i * gg
        h = o * jnp.tanh(c)
    logit = h @ params["w_fc"] + params["b_fc"]
    return jax.nn.sigmoid(logit)[:, 0], (h, c)


def init_params(key, vocab_size, embedding_dim, hidden_dim, output_dim=1):
    ks = jax.random.split(key, 7)
    s = 0.1
    return {
        "embedding": s * jax.random.normal(ks[0], (vocab_size, embedding_dim),
                                           jnp.float32),
        # pre-transposed: x @ w_ih, h @ w_hh ; gate order i,f,g,o (PyTorch)
        "w_ih": s * jax.random.normal(ks[1], (embedding_dim, 4 * hidden_dim),
                                      jnp.float32),
        "w_hh": s * jax.random.normal(ks[2], (hidden_dim, 4 * hidden_dim),
                                      jnp.float32),
        "b_ih": s * jax.random.normal(ks[3], (4 * hidden_dim,), jnp.float32),
        "b_hh": s * jax.random.normal(ks[4], (4 * hidden_dim,), jnp.float32),
        "w_fc": s * jax.random.normal(ks[5], (hidden_dim, output_dim),
                                      jnp.float32),
        "b_fc": s * jax.random.normal(ks[6], (output_dim,), jnp.float32),
    }


if __name__ == "__main__":
    # Small shapes consistent with the module's forward.
    VOCAB = 100
    EMBED = 64
    HIDDEN = 64      # padded to 128 inside the kernel for lane alignment
    BATCH = 8
    SEQ = 8

    key = jax.random.PRNGKey(0)
    k_par, k_tok = jax.random.split(key)

    params = init_params(k_par, VOCAB, EMBED, HIDDEN)
    tokens = jax.random.randint(k_tok, (BATCH, SEQ), 0, VOCAB, dtype=jnp.int32)

    # One-time weight preparation (hoisted out of the jitted forward).
    prepped = jax.tree_util.tree_map(jax.block_until_ready,
                                     prepare_params(params))

    # init_hidden equivalent (single LSTM layer actually consumed).
    h0 = jnp.zeros((BATCH, HIDDEN), jnp.float32)
    c0 = jnp.zeros((BATCH, HIDDEN), jnp.float32)

    fwd = jax.jit(my_model_forward)
    sig_out, (h_n, c_n) = fwd(tokens, (h0, c0), prepped)
    jax.block_until_ready((sig_out, h_n, c_n))

    assert sig_out.shape == (BATCH,)
    assert h_n.shape == (BATCH, HIDDEN) and c_n.shape == (BATCH, HIDDEN)
    assert bool(jnp.all((sig_out >= 0.0) & (sig_out <= 1.0)))

    # Numerical check against a pure-JAX f32 reference (bf16 MXU operands ->
    # generous-but-tight tolerance).
    ref_sig, (ref_h, ref_c) = _reference_forward(tokens, (h0, c0), params)
    np.testing.assert_allclose(np.asarray(sig_out), np.asarray(ref_sig),
                               atol=2e-2, rtol=2e-2)
    np.testing.assert_allclose(np.asarray(h_n), np.asarray(ref_h),
                               atol=2e-2, rtol=2e-2)
    np.testing.assert_allclose(np.asarray(c_n), np.asarray(ref_c),
                               atol=2e-2, rtol=2e-2)

    print("KERNEL_OK")
</pallas_src>

<mosaic_0001>
module attributes {stable_mosaic.version = 11 : i64} {
  func.func @_lstm_fc_kernel(%arg0: memref<64x1xi32, #tpu.memory_space<vmem>>, %arg1: memref<128x512xbf16, #tpu.memory_space<vmem>>, %arg2: memref<128x512xbf16, #tpu.memory_space<vmem>>, %arg3: memref<1x512xf32, #tpu.memory_space<vmem>>, %arg4: memref<8x128xf32, #tpu.memory_space<vmem>>, %arg5: memref<8x128xf32, #tpu.memory_space<vmem>>, %arg6: memref<1x128xf32, #tpu.memory_space<vmem>>, %arg7: memref<1xf32, #tpu.memory_space<smem>>, %arg8: memref<8x1xf32, #tpu.memory_space<vmem>>, %arg9: memref<8x128xf32, #tpu.memory_space<vmem>>, %arg10: memref<8x128xf32, #tpu.memory_space<vmem>>, %arg11: memref<64x512xf32, #tpu.memory_space<vmem>>) attributes {dimension_semantics = [], scalar_prefetch = 0 : i64, scratch_operands = 1 : i64, tpu.core_type = #tpu.core_type<tc>} {
    %0 = tpu.iota {dimensions = array<i32: 1>} : vector<64x128xi32>
    %c0 = arith.constant 0 : index
    %c0_0 = arith.constant 0 : index
    %1 = vector.load %arg0[%c0, %c0_0] : memref<64x1xi32, #tpu.memory_space<vmem>>, vector<64x1xi32>
    %2 = vector.broadcast %1 : vector<64x1xi32> to vector<64x128xi32>
    %3 = arith.cmpi eq, %0, %2 : vector<64x128xi32>
    %4 = arith.extui %3 : vector<64x128xi1> to vector<64x128xi32>
    %5 = arith.sitofp %4 : vector<64x128xi32> to vector<64x128xf32>
    %6 = arith.truncf %5 : vector<64x128xf32> to vector<64x128xbf16>
    %c0_1 = arith.constant 0 : index
    %c0_2 = arith.constant 0 : index
    %7 = vector.load %arg1[%c0_1, %c0_2] : memref<128x512xbf16, #tpu.memory_space<vmem>>, vector<128x512xbf16>
    %cst = arith.constant dense<0.000000e+00> : vector<64x512xf32>
    %8 = tpu.matmul %6, %7, %cst {dimension_numbers = #tpu.dot_dimension_numbers<[1], [0], [0], [1], [0, 0, 1, 1], [], []>} : vector<64x128xbf16>, vector<128x512xbf16>, vector<64x512xf32> -> vector<64x512xf32>
    %c0_3 = arith.constant 0 : index
    %c0_4 = arith.constant 0 : index
    %9 = vector.load %arg3[%c0_3, %c0_4] : memref<1x512xf32, #tpu.memory_space<vmem>>, vector<1x512xf32>
    %10 = vector.broadcast %9 : vector<1x512xf32> to vector<64x512xf32>
    %11 = arith.addf %8, %10 : vector<64x512xf32>
    %c0_5 = arith.constant 0 : index
    %c0_6 = arith.constant 0 : index
    %12 = vector.load %arg11[%c0_5, %c0_6] : memref<64x512xf32, #tpu.memory_space<vmem>>, vector<64x512xf32>
    tpu.vector_store %arg11[%c0_5, %c0_6], %11 {strides = array<i32>} : memref<64x512xf32, #tpu.memory_space<vmem>>, vector<64x512xf32>,
    %c0_7 = arith.constant 0 : index
    %c0_8 = arith.constant 0 : index
    %13 = vector.load %arg4[%c0_7, %c0_8] : memref<8x128xf32, #tpu.memory_space<vmem>>, vector<8x128xf32>
    %c0_9 = arith.constant 0 : index
    %c0_10 = arith.constant 0 : index
    %14 = vector.load %arg5[%c0_9, %c0_10] : memref<8x128xf32, #tpu.memory_space<vmem>>, vector<8x128xf32>
    %c0_11 = arith.constant 0 : index
    %c0_12 = arith.constant 0 : index
    %15 = vector.load %arg11[%c0_11, %c0_12] : memref<64x512xf32, #tpu.memory_space<vmem>>, vector<8x512xf32>
    %16 = arith.truncf %13 : vector<8x128xf32> to vector<8x128xbf16>
    %c0_13 = arith.constant 0 : index
    %c0_14 = arith.constant 0 : index
    %17 = vector.load %arg2[%c0_13, %c0_14] : memref<128x512xbf16, #tpu.memory_space<vmem>>, vector<128x512xbf16>
    %cst_15 = arith.constant dense<0.000000e+00> : vector<8x512xf32>
    %18 = tpu.matmul %16, %17, %cst_15 {dimension_numbers = #tpu.dot_dimension_numbers<[1], [0], [0], [1], [0, 0, 1, 1], [], []>} : vector<8x128xbf16>, vector<128x512xbf16>, vector<8x512xf32> -> vector<8x512xf32>
    %19 = arith.addf %15, %18 : vector<8x512xf32>
    %20 = vector.extract_strided_slice %19 {offsets = [0, 0], sizes = [8, 384], strides = [1, 1]} : vector<8x512xf32> to vector<8x384xf32>
    %21 = arith.negf %20 : vector<8x384xf32>
    %22 = math.exp %21 : vector<8x384xf32>
    %cst_16 = arith.constant 1.000000e+00 : f32
    %23 = vector.broadcast %cst_16 : f32 to vector<8x384xf32>
    %24 = arith.addf %23, %22 : vector<8x384xf32>
    %25 = arith.divf %23, %24 : vector<8x384xf32>
    %26 = vector.extract_strided_slice %19 {offsets = [0, 384], sizes = [8, 128], strides = [1, 1]} : vector<8x512xf32> to vector<8x128xf32>
    %27 = math.tanh %26 : vector<8x128xf32>
    %28 = vector.extract_strided_slice %25 {offsets = [0, 0], sizes = [8, 128], strides = [1, 1]} : vector<8x384xf32> to vector<8x128xf32>
    %29 = vector.extract_strided_slice %25 {offsets = [0, 128], sizes = [8, 128], strides = [1, 1]} : vector<8x384xf32> to vector<8x128xf32>
    %30 = vector.extract_strided_slice %25 {offsets = [0, 256], sizes = [8, 128], strides = [1, 1]} : vector<8x384xf32> to vector<8x128xf32>
    %31 = arith.mulf %29, %14 : vector<8x128xf32>
    %32 = arith.mulf %28, %27 : vector<8x128xf32>
    %33 = arith.addf %31, %32 : vector<8x128xf32>
    %34 = math.tanh %33 : vector<8x128xf32>
    %35 = arith.mulf %30, %34 : vector<8x128xf32>
    %c8 = arith.constant 8 : index
    %c0_17 = arith.constant 0 : index
    %36 = vector.load %arg11[%c8, %c0_17] : memref<64x512xf32, #tpu.memory_space<vmem>>, vector<8x512xf32>
    %37 = arith.truncf %35 : vector<8x128xf32> to vector<8x128xbf16>
    %c0_18 = arith.constant 0 : index
    %c0_19 = arith.constant 0 : index
    %38 = vector.load %arg2[%c0_18, %c0_19] : memref<128x512xbf16, #tpu.memory_space<vmem>>, vector<128x512xbf16>
    %cst_20 = arith.constant dense<0.000000e+00> : vector<8x512xf32>
    %39 = tpu.matmul %37, %38, %cst_20 {dimension_numbers = #tpu.dot_dimension_numbers<[1], [0], [0], [1], [0, 0, 1, 1], [], []>} : vector<8x128xbf16>, vector<128x512xbf16>, vector<8x512xf32> -> vector<8x512xf32>
    %40 = arith.addf %36, %39 : vector<8x512xf32>
    %41 = vector.extract_strided_slice %40 {offsets = [0, 0], sizes = [8, 384], strides = [1, 1]} : vector<8x512xf32> to vector<8x384xf32>
    %42 = arith.negf %41 : vector<8x384xf32>
    %43 = math.exp %42 : vector<8x384xf32>
    %cst_21 = arith.constant 1.000000e+00 : f32
    %44 = vector.broadcast %cst_21 : f32 to vector<8x384xf32>
    %45 = arith.addf %44, %43 : vector<8x384xf32>
    %46 = arith.divf %44, %45 : vector<8x384xf32>
    %47 = vector.extract_strided_slice %40 {offsets = [0, 384], sizes = [8, 128], strides = [1, 1]} : vector<8x512xf32> to vector<8x128xf32>
    %48 = math.tanh %47 : vector<8x128xf32>
    %49 = vector.extract_strided_slice %46 {offsets = [0, 0], sizes = [8, 128], strides = [1, 1]} : vector<8x384xf32> to vector<8x128xf32>
    %50 = vector.extract_strided_slice %46 {offsets = [0, 128], sizes = [8, 128], strides = [1, 1]} : vector<8x384xf32> to vector<8x128xf32>
    %51 = vector.extract_strided_slice %46 {offsets = [0, 256], sizes = [8, 128], strides = [1, 1]} : vector<8x384xf32> to vector<8x128xf32>
    %52 = arith.mulf %50, %33 : vector<8x128xf32>
    %53 = arith.mulf %49, %48 : vector<8x128xf32>
    %54 = arith.addf %52, %53 : vector<8x128xf32>
    %55 = math.tanh %54 : vector<8x128xf32>
    %56 = arith.mulf %51, %55 : vector<8x128xf32>
    %c16 = arith.constant 16 : index
    %c0_22 = arith.constant 0 : index
    %57 = vector.load %arg11[%c16, %c0_22] : memref<64x512xf32, #tpu.memory_space<vmem>>, vector<8x512xf32>
    %58 = arith.truncf %56 : vector<8x128xf32> to vector<8x128xbf16>
    %c0_23 = arith.constant 0 : index
    %c0_24 = arith.constant 0 : index
    %59 = vector.load %arg2[%c0_23, %c0_24] : memref<128x512xbf16, #tpu.memory_space<vmem>>, vector<128x512xbf16>
    %cst_25 = arith.constant dense<0.000000e+00> : vector<8x512xf32>
    %60 = tpu.matmul %58, %59, %cst_25 {dimension_numbers = #tpu.dot_dimension_numbers<[1], [0], [0], [1], [0, 0, 1, 1], [], []>} : vector<8x128xbf16>, vector<128x512xbf16>, vector<8x512xf32> -> vector<8x512xf32>
    %61 = arith.addf %57, %60 : vector<8x512xf32>
    %62 = vector.extract_strided_slice %61 {offsets = [0, 0], sizes = [8, 384], strides = [1, 1]} : vector<8x512xf32> to vector<8x384xf32>
    %63 = arith.negf %62 : vector<8x384xf32>
    %64 = math.exp %63 : vector<8x384xf32>
    %cst_26 = arith.constant 1.000000e+00 : f32
    %65 = vector.broadcast %cst_26 : f32 to vector<8x384xf32>
    %66 = arith.addf %65, %64 : vector<8x384xf32>
    %67 = arith.divf %65, %66 : vector<8x384xf32>
    %68 = vector.extract_strided_slice %61 {offsets = [0, 384], sizes = [8, 128], strides = [1, 1]} : vector<8x512xf32> to vector<8x128xf32>
    %69 = math.tanh %68 : vector<8x128xf32>
    %70 = vector.extract_strided_slice %67 {offsets = [0, 0], sizes = [8, 128], strides = [1, 1]} : vector<8x384xf32> to vector<8x128xf32>
    %71 = vector.extract_strided_slice %67 {offsets = [0, 128], sizes = [8, 128], strides = [1, 1]} : vector<8x384xf32> to vector<8x128xf32>
    %72 = vector.extract_strided_slice %67 {offsets = [0, 256], sizes = [8, 128], strides = [1, 1]} : vector<8x384xf32> to vector<8x128xf32>
    %73 = arith.mulf %71, %54 : vector<8x128xf32>
    %74 = arith.mulf %70, %69 : vector<8x128xf32>
    %75 = arith.addf %73, %74 : vector<8x128xf32>
    %76 = math.tanh %75 : vector<8x128xf32>
    %77 = arith.mulf %72, %76 : vector<8x128xf32>
    %c24 = arith.constant 24 : index
    %c0_27 = arith.constant 0 : index
    %78 = vector.load %arg11[%c24, %c0_27] : memref<64x512xf32, #tpu.memory_space<vmem>>, vector<8x512xf32>
    %79 = arith.truncf %77 : vector<8x128xf32> to vector<8x128xbf16>
    %c0_28 = arith.constant 0 : index
    %c0_29 = arith.constant 0 : index
    %80 = vector.load %arg2[%c0_28, %c0_29] : memref<128x512xbf16, #tpu.memory_space<vmem>>, vector<128x512xbf16>
    %cst_30 = arith.constant dense<0.000000e+00> : vector<8x512xf32>
    %81 = tpu.matmul %79, %80, %cst_30 {dimension_numbers = #tpu.dot_dimension_numbers<[1], [0], [0], [1], [0, 0, 1, 1], [], []>} : vector<8x128xbf16>, vector<128x512xbf16>, vector<8x512xf32> -> vector<8x512xf32>
    %82 = arith.addf %78, %81 : vector<8x512xf32>
    %83 = vector.extract_strided_slice %82 {offsets = [0, 0], sizes = [8, 384], strides = [1, 1]} : vector<8x512xf32> to vector<8x384xf32>
    %84 = arith.negf %83 : vector<8x384xf32>
    %85 = math.exp %84 : vector<8x384xf32>
    %cst_31 = arith.constant 1.000000e+00 : f32
    %86 = vector.broadcast %cst_31 : f32 to vector<8x384xf32>
    %87 = arith.addf %86, %85 : vector<8x384xf32>
    %88 = arith.divf %86, %87 : vector<8x384xf32>
    %89 = vector.extract_strided_slice %82 {offsets = [0, 384], sizes = [8, 128], strides = [1, 1]} : vector<8x512xf32> to vector<8x128xf32>
    %90 = math.tanh %89 : vector<8x128xf32>
    %91 = vector.extract_strided_slice %88 {offsets = [0, 0], sizes = [8, 128], strides = [1, 1]} : vector<8x384xf32> to vector<8x128xf32>
    %92 = vector.extract_strided_slice %88 {offsets = [0, 128], sizes = [8, 128], strides = [1, 1]} : vector<8x384xf32> to vector<8x128xf32>
    %93 = vector.extract_strided_slice %88 {offsets = [0, 256], sizes = [8, 128], strides = [1, 1]} : vector<8x384xf32> to vector<8x128xf32>
    %94 = arith.mulf %92, %75 : vector<8x128xf32>
    %95 = arith.mulf %91, %90 : vector<8x128xf32>
    %96 = arith.addf %94, %95 : vector<8x128xf32>
    %97 = math.tanh %96 : vector<8x128xf32>
    %98 = arith.mulf %93, %97 : vector<8x128xf32>
    %c32 = arith.constant 32 : index
    %c0_32 = arith.constant 0 : index
    %99 = vector.load %arg11[%c32, %c0_32] : memref<64x512xf32, #tpu.memory_space<vmem>>, vector<8x512xf32>
    %100 = arith.truncf %98 : vector<8x128xf32> to vector<8x128xbf16>
    %c0_33 = arith.constant 0 : index
    %c0_34 = arith.constant 0 : index
    %101 = vector.load %arg2[%c0_33, %c0_34] : memref<128x512xbf16, #tpu.memory_space<vmem>>, vector<128x512xbf16>
    %cst_35 = arith.constant dense<0.000000e+00> : vector<8x512xf32>
    %102 = tpu.matmul %100, %101, %cst_35 {dimension_numbers = #tpu.dot_dimension_numbers<[1], [0], [0], [1], [0, 0, 1, 1], [], []>} : vector<8x128xbf16>, vector<128x512xbf16>, vector<8x512xf32> -> vector<8x512xf32>
    %103 = arith.addf %99, %102 : vector<8x512xf32>
    %104 = vector.extract_strided_slice %103 {offsets = [0, 0], sizes = [8, 384], strides = [1, 1]} : vector<8x512xf32> to vector<8x384xf32>
    %105 = arith.negf %104 : vector<8x384xf32>
    %106 = math.exp %105 : vector<8x384xf32>
    %cst_36 = arith.constant 1.000000e+00 : f32
    %107 = vector.broadcast %cst_36 : f32 to vector<8x384xf32>
    %108 = arith.addf %107, %106 : vector<8x384xf32>
    %109 = arith.divf %107, %108 : vector<8x384xf32>
    %110 = vector.extract_strided_slice %103 {offsets = [0, 384], sizes = [8, 128], strides = [1, 1]} : vector<8x512xf32> to vector<8x128xf32>
    %111 = math.tanh %110 : vector<8x128xf32>
    %112 = vector.extract_strided_slice %109 {offsets = [0, 0], sizes = [8, 128], strides = [1, 1]} : vector<8x384xf32> to vector<8x128xf32>
    %113 = vector.extract_strided_slice %109 {offsets = [0, 128], sizes = [8, 128], strides = [1, 1]} : vector<8x384xf32> to vector<8x128xf32>
    %114 = vector.extract_strided_slice %109 {offsets = [0, 256], sizes = [8, 128], strides = [1, 1]} : vector<8x384xf32> to vector<8x128xf32>
    %115 = arith.mulf %113, %96 : vector<8x128xf32>
    %116 = arith.mulf %112, %111 : vector<8x128xf32>
    %117 = arith.addf %115, %116 : vector<8x128xf32>
    %118 = math.tanh %117 : vector<8x128xf32>
    %119 = arith.mulf %114, %118 : vector<8x128xf32>
    %c40 = arith.constant 40 : index
    %c0_37 = arith.constant 0 : index
    %120 = vector.load %arg11[%c40, %c0_37] : memref<64x512xf32, #tpu.memory_space<vmem>>, vector<8x512xf32>
    %121 = arith.truncf %119 : vector<8x128xf32> to vector<8x128xbf16>
    %c0_38 = arith.constant 0 : index
    %c0_39 = arith.constant 0 : index
    %122 = vector.load %arg2[%c0_38, %c0_39] : memref<128x512xbf16, #tpu.memory_space<vmem>>, vector<128x512xbf16>
    %cst_40 = arith.constant dense<0.000000e+00> : vector<8x512xf32>
    %123 = tpu.matmul %121, %122, %cst_40 {dimension_numbers = #tpu.dot_dimension_numbers<[1], [0], [0], [1], [0, 0, 1, 1], [], []>} : vector<8x128xbf16>, vector<128x512xbf16>, vector<8x512xf32> -> vector<8x512xf32>
    %124 = arith.addf %120, %123 : vector<8x512xf32>
    %125 = vector.extract_strided_slice %124 {offsets = [0, 0], sizes = [8, 384], strides = [1, 1]} : vector<8x512xf32> to vector<8x384xf32>
    %126 = arith.negf %125 : vector<8x384xf32>
    %127 = math.exp %126 : vector<8x384xf32>
    %cst_41 = arith.constant 1.000000e+00 : f32
    %128 = vector.broadcast %cst_41 : f32 to vector<8x384xf32>
    %129 = arith.addf %128, %127 : vector<8x384xf32>
    %130 = arith.divf %128, %129 : vector<8x384xf32>
    %131 = vector.extract_strided_slice %124 {offsets = [0, 384], sizes = [8, 128], strides = [1, 1]} : vector<8x512xf32> to vector<8x128xf32>
    %132 = math.tanh %131 : vector<8x128xf32>
    %133 = vector.extract_strided_slice %130 {offsets = [0, 0], sizes = [8, 128], strides = [1, 1]} : vector<8x384xf32> to vector<8x128xf32>
    %134 = vector.extract_strided_slice %130 {offsets = [0, 128], sizes = [8, 128], strides = [1, 1]} : vector<8x384xf32> to vector<8x128xf32>
    %135 = vector.extract_strided_slice %130 {offsets = [0, 256], sizes = [8, 128], strides = [1, 1]} : vector<8x384xf32> to vector<8x128xf32>
    %136 = arith.mulf %134, %117 : vector<8x128xf32>
    %137 = arith.mulf %133, %132 : vector<8x128xf32>
    %138 = arith.addf %136, %137 : vector<8x128xf32>
    %139 = math.tanh %138 : vector<8x128xf32>
    %140 = arith.mulf %135, %139 : vector<8x128xf32>
    %c48 = arith.constant 48 : index
    %c0_42 = arith.constant 0 : index
    %141 = vector.load %arg11[%c48, %c0_42] : memref<64x512xf32, #tpu.memory_space<vmem>>, vector<8x512xf32>
    %142 = arith.truncf %140 : vector<8x128xf32> to vector<8x128xbf16>
    %c0_43 = arith.constant 0 : index
    %c0_44 = arith.constant 0 : index
    %143 = vector.load %arg2[%c0_43, %c0_44] : memref<128x512xbf16, #tpu.memory_space<vmem>>, vector<128x512xbf16>
    %cst_45 = arith.constant dense<0.000000e+00> : vector<8x512xf32>
    %144 = tpu.matmul %142, %143, %cst_45 {dimension_numbers = #tpu.dot_dimension_numbers<[1], [0], [0], [1], [0, 0, 1, 1], [], []>} : vector<8x128xbf16>, vector<128x512xbf16>, vector<8x512xf32> -> vector<8x512xf32>
    %145 = arith.addf %141, %144 : vector<8x512xf32>
    %146 = vector.extract_strided_slice %145 {offsets = [0, 0], sizes = [8, 384], strides = [1, 1]} : vector<8x512xf32> to vector<8x384xf32>
    %147 = arith.negf %146 : vector<8x384xf32>
    %148 = math.exp %147 : vector<8x384xf32>
    %cst_46 = arith.constant 1.000000e+00 : f32
    %149 = vector.broadcast %cst_46 : f32 to vector<8x384xf32>
    %150 = arith.addf %149, %148 : vector<8x384xf32>
    %151 = arith.divf %149, %150 : vector<8x384xf32>
    %152 = vector.extract_strided_slice %145 {offsets = [0, 384], sizes = [8, 128], strides = [1, 1]} : vector<8x512xf32> to vector<8x128xf32>
    %153 = math.tanh %152 : vector<8x128xf32>
    %154 = vector.extract_strided_slice %151 {offsets = [0, 0], sizes = [8, 128], strides = [1, 1]} : vector<8x384xf32> to vector<8x128xf32>
    %155 = vector.extract_strided_slice %151 {offsets = [0, 128], sizes = [8, 128], strides = [1, 1]} : vector<8x384xf32> to vector<8x128xf32>
    %156 = vector.extract_strided_slice %151 {offsets = [0, 256], sizes = [8, 128], strides = [1, 1]} : vector<8x384xf32> to vector<8x128xf32>
    %157 = arith.mulf %155, %138 : vector<8x128xf32>
    %158 = arith.mulf %154, %153 : vector<8x128xf32>
    %159 = arith.addf %157, %158 : vector<8x128xf32>
    %160 = math.tanh %159 : vector<8x128xf32>
    %161 = arith.mulf %156, %160 : vector<8x128xf32>
    %c56 = arith.constant 56 : index
    %c0_47 = arith.constant 0 : index
    %162 = vector.load %arg11[%c56, %c0_47] : memref<64x512xf32, #tpu.memory_space<vmem>>, vector<8x512xf32>
    %163 = arith.truncf %161 : vector<8x128xf32> to vector<8x128xbf16>
    %c0_48 = arith.constant 0 : index
    %c0_49 = arith.constant 0 : index
    %164 = vector.load %arg2[%c0_48, %c0_49] : memref<128x512xbf16, #tpu.memory_space<vmem>>, vector<128x512xbf16>
    %cst_50 = arith.constant dense<0.000000e+00> : vector<8x512xf32>
    %165 = tpu.matmul %163, %164, %cst_50 {dimension_numbers = #tpu.dot_dimension_numbers<[1], [0], [0], [1], [0, 0, 1, 1], [], []>} : vector<8x128xbf16>, vector<128x512xbf16>, vector<8x512xf32> -> vector<8x512xf32>
    %166 = arith.addf %162, %165 : vector<8x512xf32>
    %167 = vector.extract_strided_slice %166 {offsets = [0, 0], sizes = [8, 384], strides = [1, 1]} : vector<8x512xf32> to vector<8x384xf32>
    %168 = arith.negf %167 : vector<8x384xf32>
    %169 = math.exp %168 : vector<8x384xf32>
    %cst_51 = arith.constant 1.000000e+00 : f32
    %170 = vector.broadcast %cst_51 : f32 to vector<8x384xf32>
    %171 = arith.addf %170, %169 : vector<8x384xf32>
    %172 = arith.divf %170, %171 : vector<8x384xf32>
    %173 = vector.extract_strided_slice %166 {offsets = [0, 384], sizes = [8, 128], strides = [1, 1]} : vector<8x512xf32> to vector<8x128xf32>
    %174 = math.tanh %173 : vector<8x128xf32>
    %175 = vector.extract_strided_slice %172 {offsets = [0, 0], sizes = [8, 128], strides = [1, 1]} : vector<8x384xf32> to vector<8x128xf32>
    %176 = vector.extract_strided_slice %172 {offsets = [0, 128], sizes = [8, 128], strides = [1, 1]} : vector<8x384xf32> to vector<8x128xf32>
    %177 = vector.extract_strided_slice %172 {offsets = [0, 256], sizes = [8, 128], strides = [1, 1]} : vector<8x384xf32> to vector<8x128xf32>
    %178 = arith.mulf %176, %159 : vector<8x128xf32>
    %179 = arith.mulf %175, %174 : vector<8x128xf32>
    %180 = arith.addf %178, %179 : vector<8x128xf32>
    %181 = math.tanh %180 : vector<8x128xf32>
    %182 = arith.mulf %177, %181 : vector<8x128xf32>
    %c0_52 = arith.constant 0 : index
    %c0_53 = arith.constant 0 : index
    %183 = vector.load %arg9[%c0_52, %c0_53] : memref<8x128xf32, #tpu.memory_space<vmem>>, vector<8x128xf32>
    tpu.vector_store %arg9[%c0_52, %c0_53], %182 {strides = array<i32>} : memref<8x128xf32, #tpu.memory_space<vmem>>, vector<8x128xf32>,
    %c0_54 = arith.constant 0 : index
    %c0_55 = arith.constant 0 : index
    %184 = vector.load %arg10[%c0_54, %c0_55] : memref<8x128xf32, #tpu.memory_space<vmem>>, vector<8x128xf32>
    tpu.vector_store %arg10[%c0_54, %c0_55], %180 {strides = array<i32>} : memref<8x128xf32, #tpu.memory_space<vmem>>, vector<8x128xf32>,
    %c0_56 = arith.constant 0 : index
    %c0_57 = arith.constant 0 : index
    %185 = vector.load %arg6[%c0_56, %c0_57] : memref<1x128xf32, #tpu.memory_space<vmem>>, vector<1x128xf32>
    %186 = vector.broadcast %185 : vector<1x128xf32> to vector<8x128xf32>
    %187 = arith.mulf %182, %186 : vector<8x128xf32>
    %cst_58 = arith.constant dense<0.000000e+00> : vector<8xf32>
    %188 = vector.multi_reduction <add>, %187, %cst_58 [1] : vector<8x128xf32> to vector<8xf32>
    %189 = vector.shape_cast %188 : vector<8xf32> to vector<8x1xf32>
    %c0_59 = arith.constant 0 : index
    %190 = memref.load %arg7[%c0_59] : memref<1xf32, #tpu.memory_space<smem>>
    %191 = vector.broadcast %190 : f32 to vector<8x1xf32>
    %192 = arith.addf %189, %191 : vector<8x1xf32>
    %193 = arith.negf %192 : vector<8x1xf32>
    %194 = math.exp %193 : vector<8x1xf32>
    %cst_60 = arith.constant 1.000000e+00 : f32
    %195 = vector.broadcast %cst_60 : f32 to vector<8x1xf32>
    %196 = arith.addf %195, %194 : vector<8x1xf32>
    %197 = arith.divf %195, %196 : vector<8x1xf32>
    %c0_61 = arith.constant 0 : index
    %c0_62 = arith.constant 0 : index
    %198 = vector.load %arg8[%c0_61, %c0_62] : memref<8x1xf32, #tpu.memory_space<vmem>>, vector<8x1xf32>
    tpu.vector_store %arg8[%c0_61, %c0_62], %197 {strides = array<i32>} : memref<8x1xf32, #tpu.memory_space<vmem>>, vector<8x1xf32>,
    return
  }
}

</mosaic_0001>

<llo_original>
// kernel: my_model_forward.1
$region0: #{my_model_forward.1}
  #allocation0 [shape = 'u32[]', space=smem, size = 0x4, offset = 0x4, fixed_abs, tag = 'smem constant byte address 0x4 - core index']
  #allocation1 [shape = 'u32[144,128]{1,0:T(1,128)}', space=vmem, size = 0x12000, scoped, tag = 'internal scratch']
  #allocation2 [shape = 'f32[64,512]{1,0:T(8,128)}', space=vmem, size = 0x20000, scoped, tag = 'scratch operand']
  #allocation3 [shape = 'f32[1]{0:T(128)S(6)}', space=smem, size = 0x200, scoped, tag = 'scoped memory for my_model_forward.1']
  %s0 = inlined_call_operand.vmem [shape: s32[64,1], index: 0, kind: input, shape index: {}]
  %s1 = inlined_call_operand.hbm [shape: bf16[128,512], index: 1, kind: input, shape index: {}]
  %s2 = inlined_call_operand.hbm [shape: bf16[128,512], index: 2, kind: input, shape index: {}]
  %s3 = inlined_call_operand.vmem [shape: f32[1,512], index: 3, kind: input, shape index: {}]
  %s4 = inlined_call_operand.vmem [shape: f32[8,128], index: 4, kind: input, shape index: {}]
  %s5 = inlined_call_operand.vmem [shape: f32[8,128], index: 5, kind: input, shape index: {}]
  %s6 = inlined_call_operand.vmem [shape: f32[1,128], index: 6, kind: input, shape index: {}]
  %s7 = inlined_call_operand.<no memory space> [shape: f32[1], index: 7, kind: input, shape index: {}]
  %s8 = inlined_call_operand.vmem [shape: f32[8,1], index: 8, kind: output, shape index: {0}]
  %s9 = inlined_call_operand.hbm [shape: f32[8,128], index: 9, kind: output, shape index: {1}]
  %s10 = inlined_call_operand.hbm [shape: f32[8,128], index: 10, kind: output, shape index: {2}]
  %11 = xla_tuple %s8, %s9, %s10
  %s12 = sld [smem:[#allocation0]]
  $region66: #{my_model_forward.1} parent=0
    _
  %s14 = ssub.s32 1, %s12
  %s15 = scalar_select 0, %s14, %s12
  %16 = sst [smem:[#allocation3]] %s7
  $region1: #{my_model_forward.1} parent=0
    #allocation4 [shape = 'u8[131072]{0}', space=vmem, size = 0x20000, scoped, tag = 'input window, operand 1, single buffered']
    #allocation5 [shape = 's32[1]{0}', space=sflag, size = 0x4, scoped, tag = 'scoped memory for my_model_forward.1']
    #allocation6 [shape = 's32[1]{0}', space=sflag, size = 0x4, scoped, tag = 'scoped memory for my_model_forward.1']
    #allocation7 [shape = 'u8[131072]{0}', space=vmem, size = 0x20000, scoped, tag = 'input window, operand 2, single buffered']
    #allocation8 [shape = 's32[1]{0}', space=sflag, size = 0x4, scoped, tag = 'scoped memory for my_model_forward.1']
    #allocation9 [shape = 'u8[4096]{0}', space=vmem, size = 0x1000, scoped, tag = 'output window, operand 1, single buffered']
    #allocation10 [shape = 'u8[4096]{0}', space=vmem, size = 0x1000, scoped, tag = 'output window, operand 2, single buffered']
    #allocation11 [shape = 's32[1]{0}', space=sflag, size = 0x4, scoped, tag = 'scoped memory for my_model_forward.1']
    %17 = vsyncpa [#allocation5], 0
    %18 = vsyncpa [#allocation8], 0
    %19 = vsyncpa [#allocation6], 0
    %20 = vsyncpa [#allocation11], 0
    // Predicated region
    $region2: #{my_model_forward.1} parent=1 // pred_check
      _
    $region3: #{my_model_forward.1} parent=1 // pred_check_branch
      %22 = sbr.rel (0) target = $region5
    $region4: #{my_model_forward.1} parent=1 // pred_region
      _
    $region5: #{my_model_forward.1} parent=1 // pred_fallthru
      _
    // Predicated region
    $region6: #{my_model_forward.1} parent=1 // pred_check
      _
    $region7: #{my_model_forward.1} parent=1 // pred_check_branch
      %24 = sbr.rel (0) target = $region9
    $region8: #{my_model_forward.1} parent=1 // pred_region
      %s26 = ssub.s32 4096, 4096
      %27 = vsyncadd [#allocation5], %s26
      %s28 = sshll.u32 [#allocation4], 4
      %s29 = int_to_ptr.vmem [resolvable:$true] %s28
      %34 = dma.hbm_to_vmem [thread:$0]  %s1, 4096, %s29, [#allocation5], 256, 256, 16
    $region9: #{my_model_forward.1} parent=1 // pred_fallthru
      _
    // Predicated region
    $region10: #{my_model_forward.1} parent=1 // pred_check
      _
    $region11: #{my_model_forward.1} parent=1 // pred_check_branch
      %36 = sbr.rel (0) target = $region13
    $region12: #{my_model_forward.1} parent=1 // pred_region
      %s38 = ssub.s32 4096, 4096
      %39 = vsyncadd [#allocation8], %s38
      %s40 = sshll.u32 [#allocation7], 4
      %s41 = int_to_ptr.vmem [resolvable:$true] %s40
      %46 = dma.hbm_to_vmem [thread:$0]  %s2, 4096, %s41, [#allocation8], 256, 256, 16
    $region13: #{my_model_forward.1} parent=1 // pred_fallthru
      _
    // Predicated region
    $region14: #{my_model_forward.1} parent=1 // pred_check
      _
    $region15: #{my_model_forward.1} parent=1 // pred_check_branch
      %48 = sbr.rel (0) target = $region17
    $region16: #{my_model_forward.1} parent=1 // pred_region
      _
    $region17: #{my_model_forward.1} parent=1 // pred_fallthru
      _
    // Predicated region
    $region18: #{my_model_forward.1} parent=1 // pred_check
      _
    $region19: #{my_model_forward.1} parent=1 // pred_check_branch
      %50 = sbr.rel (0) target = $region21
    $region20: #{my_model_forward.1} parent=1 // pred_region
      _
    $region21: #{my_model_forward.1} parent=1 // pred_fallthru
      _
    // Predicated region
    $region22: #{my_model_forward.1} parent=1 // pred_check
      _
    $region23: #{my_model_forward.1} parent=1 // pred_check_branch
      %52 = sbr.rel (0) target = $region25
    $region24: #{my_model_forward.1} parent=1 // pred_region
      _
    $region25: #{my_model_forward.1} parent=1 // pred_fallthru
      _
    // Predicated region
    $region26: #{my_model_forward.1} parent=1 // pred_check
      _
    $region27: #{my_model_forward.1} parent=1 // pred_check_branch
      %54 = sbr.rel (0) target = $region29
    $region28: #{my_model_forward.1} parent=1 // pred_region
      _
    $region29: #{my_model_forward.1} parent=1 // pred_fallthru
      _
    // Predicated region
    $region30: #{my_model_forward.1} parent=1 // pred_check
      _
    $region31: #{my_model_forward.1} parent=1 // pred_check_branch
      %56 = sbr.rel (0) target = $region33
    $region32: #{my_model_forward.1} parent=1 // pred_region
      _
    $region33: #{my_model_forward.1} parent=1 // pred_fallthru
      _
    // Predicated region
    $region34: #{my_model_forward.1} parent=1 // pred_check
      _
    $region35: #{my_model_forward.1} parent=1 // pred_check_branch
      %58 = sbr.rel (0) target = $region37
    $region36: #{my_model_forward.1} parent=1 // pred_region
      %59 = dma.done [#allocation5], 4096
    $region37: #{my_model_forward.1} parent=1 // pred_fallthru
      _
    // Predicated region
    $region38: #{my_model_forward.1} parent=1 // pred_check
      _
    $region39: #{my_model_forward.1} parent=1 // pred_check_branch
      %61 = sbr.rel (0) target = $region41
    $region40: #{my_model_forward.1} parent=1 // pred_region
      %62 = dma.done [#allocation8], 4096
    $region41: #{my_model_forward.1} parent=1 // pred_fallthru
      _
    %v64 = vlaneseq
    %v65 = vand.u32 %v64, 127
    %v66 = vld [vmem:[%s0] sm:$0xff]
    %v67 = vld [vmem:[%s0 + $0x8] sm:$0xff]
    %v68 = vld [vmem:[%s0 + $0x10] sm:$0xff]
    %v69 = vld [vmem:[%s0 + $0x18] sm:$0xff]
    %v70 = vld [vmem:[%s0 + $0x20] sm:$0xff]
    %v71 = vld [vmem:[%s0 + $0x28] sm:$0xff]
    %v72 = vld [vmem:[%s0 + $0x30] sm:$0xff]
    %v73 = vld [vmem:[%s0 + $0x38] sm:$0xff]
    %74 = vset.pattern.permute.xlu0 0
    %75 = vperm.xlu0 %74, %v66
    %v76 = vpop.permute.xlu0 %75
    %77 = vset.pattern.permute.xlu0 0
    %78 = vperm.xlu0 %77, %v67
    %v79 = vpop.permute.xlu0 %78
    %80 = vset.pattern.permute.xlu0 0
    %81 = vperm.xlu0 %80, %v68
    %v82 = vpop.permute.xlu0 %81
    %83 = vset.pattern.permute.xlu0 0
    %84 = vperm.xlu0 %83, %v69
    %v85 = vpop.permute.xlu0 %84
    %86 = vset.pattern.permute.xlu0 0
    %87 = vperm.xlu0 %86, %v70
    %v88 = vpop.permute.xlu0 %87
    %89 = vset.pattern.permute.xlu0 0
    %90 = vperm.xlu0 %89, %v71
    %v91 = vpop.permute.xlu0 %90
    %92 = vset.pattern.permute.xlu0 0
    %93 = vperm.xlu0 %92, %v72
    %v94 = vpop.permute.xlu0 %93
    %95 = vset.pattern.permute.xlu0 0
    %96 = vperm.xlu0 %95, %v73
    %v97 = vpop.permute.xlu0 %96
    %vm98 = vcmp.eq.s32.totalorder %v65, %v76
    %vm99 = vcmp.eq.s32.totalorder %v65, %v79
    %vm100 = vcmp.eq.s32.totalorder %v65, %v82
    %vm101 = vcmp.eq.s32.totalorder %v65, %v85
    %vm102 = vcmp.eq.s32.totalorder %v65, %v88
    %vm103 = vcmp.eq.s32.totalorder %v65, %v91
    %vm104 = vcmp.eq.s32.totalorder %v65, %v94
    %vm105 = vcmp.eq.s32.totalorder %v65, %v97
    %v106 = vsel %vm98, 1, 0
    %v107 = vsel %vm99, 1, 0
    %v108 = vsel %vm100, 1, 0
    %v109 = vsel %vm101, 1, 0
    %v110 = vsel %vm102, 1, 0
    %v111 = vsel %vm103, 1, 0
    %v112 = vsel %vm104, 1, 0
    %v113 = vsel %vm105, 1, 0
    %v114 = vcvt.s32.f32 %v106
    %v115 = vcvt.s32.f32 %v107
    %v116 = vcvt.s32.f32 %v108
    %v117 = vcvt.s32.f32 %v109
    %v118 = vcvt.s32.f32 %v110
    %v119 = vcvt.s32.f32 %v111
    %v120 = vcvt.s32.f32 %v112
    %v121 = vcvt.s32.f32 %v113
    %v122 = vpack.c.bf16 %v115, %v114
    %v123 = vpack.c.bf16 %v117, %v116
    %v124 = vpack.c.bf16 %v119, %v118
    %v125 = vpack.c.bf16 %v121, %v120
    %v126 = vld [vmem:[#allocation4] sm:$0xff]
    %v127 = vld [vmem:[#allocation4 + $0x8] sm:$0xff]
    %v128 = vld [vmem:[#allocation4 + $0x10] sm:$0xff]
    %v129 = vld [vmem:[#allocation4 + $0x18] sm:$0xff]
    %v130 = vld [vmem:[#allocation4 + $0x20] sm:$0xff]
    %v131 = vld [vmem:[#allocation4 + $0x28] sm:$0xff]
    %v132 = vld [vmem:[#allocation4 + $0x30] sm:$0xff]
    %v133 = vld [vmem:[#allocation4 + $0x38] sm:$0xff]
    %v134 = vld [vmem:[#allocation4 + $0x40] sm:$0xff]
    %v135 = vld [vmem:[#allocation4 + $0x48] sm:$0xff]
    %v136 = vld [vmem:[#allocation4 + $0x50] sm:$0xff]
    %v137 = vld [vmem:[#allocation4 + $0x58] sm:$0xff]
    %v138 = vld [vmem:[#allocation4 + $0x60] sm:$0xff]
    %v139 = vld [vmem:[#allocation4 + $0x68] sm:$0xff]
    %v140 = vld [vmem:[#allocation4 + $0x70] sm:$0xff]
    %v141 = vld [vmem:[#allocation4 + $0x78] sm:$0xff]
    %v142 = vld [vmem:[#allocation4 + $0x80] sm:$0xff]
    %v143 = vld [vmem:[#allocation4 + $0x88] sm:$0xff]
    %v144 = vld [vmem:[#allocation4 + $0x90] sm:$0xff]
    %v145 = vld [vmem:[#allocation4 + $0x98] sm:$0xff]
    %v146 = vld [vmem:[#allocation4 + $0xa0] sm:$0xff]
    %v147 = vld [vmem:[#allocation4 + $0xa8] sm:$0xff]
    %v148 = vld [vmem:[#allocation4 + $0xb0] sm:$0xff]
    %v149 = vld [vmem:[#allocation4 + $0xb8] sm:$0xff]
    %v150 = vld [vmem:[#allocation4 + $0xc0] sm:$0xff]
    %v151 = vld [vmem:[#allocation4 + $0xc8] sm:$0xff]
    %v152 = vld [vmem:[#allocation4 + $0xd0] sm:$0xff]
    %v153 = vld [vmem:[#allocation4 + $0xd8] sm:$0xff]
    %v154 = vld [vmem:[#allocation4 + $0xe0] sm:$0xff]
    %v155 = vld [vmem:[#allocation4 + $0xe8] sm:$0xff]
    %v156 = vld [vmem:[#allocation4 + $0xf0] sm:$0xff]
    %v157 = vld [vmem:[#allocation4 + $0xf8] sm:$0xff]
    %v158 = vld [vmem:[%s3] sm:$0xf]
    %v160 = vlaneseq
    %v161 = vshrl.u32 %v160, 7
    %v162 = vsub.s32 0, %v161
    %v163 = vrot.slane %v158, %v162
    %v164 = vlaneseq
    %v165 = vshrl.u32 %v164, 7
    %v166 = vsub.s32 1, %v165
    %v167 = vrot.slane %v158, %v166
    %v168 = vlaneseq
    %v169 = vshrl.u32 %v168, 7
    %v170 = vsub.s32 2, %v169
    %v171 = vrot.slane %v158, %v170
    %v172 = vlaneseq
    %v173 = vshrl.u32 %v172, 7
    %v174 = vsub.s32 3, %v173
    %v175 = vrot.slane %v158, %v174
    %v212 = vunpack.c.l.b16 %v126
    %v213 = vunpack.c.h.b16 %v126
    %v214 = vunpack.c.l.b16 %v127
    %v215 = vunpack.c.h.b16 %v127
    %v216 = vunpack.c.l.b16 %v128
    %v217 = vunpack.c.h.b16 %v128
    %v218 = vunpack.c.l.b16 %v129
    %v219 = vunpack.c.h.b16 %v129
    %v220 = vunpack.c.l.b16 %v130
    %v221 = vunpack.c.h.b16 %v130
    %v222 = vunpack.c.l.b16 %v131
    %v223 = vunpack.c.h.b16 %v131
    %v224 = vunpack.c.l.b16 %v132
    %v225 = vunpack.c.h.b16 %v132
    %v226 = vunpack.c.l.b16 %v133
    %v227 = vunpack.c.h.b16 %v133
    %v228 = vunpack.c.l.b16 %v134
    %v229 = vunpack.c.h.b16 %v134
    %v230 = vunpack.c.l.b16 %v135
    %v231 = vunpack.c.h.b16 %v135
    %v232 = vunpack.c.l.b16 %v136
    %v233 = vunpack.c.h.b16 %v136
    %v234 = vunpack.c.l.b16 %v137
    %v235 = vunpack.c.h.b16 %v137
    %v236 = vunpack.c.l.b16 %v138
    %v237 = vunpack.c.h.b16 %v138
    %v238 = vunpack.c.l.b16 %v139
    %v239 = vunpack.c.h.b16 %v139
    %v240 = vunpack.c.l.b16 %v140
    %v241 = vunpack.c.h.b16 %v140
    %v242 = vunpack.c.l.b16 %v141
    %v243 = vunpack.c.h.b16 %v141
    %v244 = vunpack.c.l.b16 %v142
    %v245 = vunpack.c.h.b16 %v142
    %v246 = vunpack.c.l.b16 %v143
    %v247 = vunpack.c.h.b16 %v143
    %v248 = vunpack.c.l.b16 %v144
    %v249 = vunpack.c.h.b16 %v144
    %v250 = vunpack.c.l.b16 %v145
    %v251 = vunpack.c.h.b16 %v145
    %v252 = vunpack.c.l.b16 %v146
    %v253 = vunpack.c.h.b16 %v146
    %v254 = vunpack.c.l.b16 %v147
    %v255 = vunpack.c.h.b16 %v147
    %v256 = vunpack.c.l.b16 %v148
    %v257 = vunpack.c.h.b16 %v148
    %v258 = vunpack.c.l.b16 %v149
    %v259 = vunpack.c.h.b16 %v149
    %v260 = vunpack.c.l.b16 %v150
    %v261 = vunpack.c.h.b16 %v150
    %v262 = vunpack.c.l.b16 %v151
    %v263 = vunpack.c.h.b16 %v151
    %v264 = vunpack.c.l.b16 %v152
    %v265 = vunpack.c.h.b16 %v152
    %v266 = vunpack.c.l.b16 %v153
    %v267 = vunpack.c.h.b16 %v153
    %v268 = vunpack.c.l.b16 %v154
    %v269 = vunpack.c.h.b16 %v154
    %v270 = vunpack.c.l.b16 %v155
    %v271 = vunpack.c.h.b16 %v155
    %v272 = vunpack.c.l.b16 %v156
    %v273 = vunpack.c.h.b16 %v156
    %v274 = vunpack.c.l.b16 %v157
    %v275 = vunpack.c.h.b16 %v157
    %v276 = vpack.c.b16 %v216, %v212
    %v277 = vpack.c.b16 %v217, %v213
    %v278 = vpack.c.b16 %v218, %v214
    %v279 = vpack.c.b16 %v219, %v215
    %v280 = vpack.c.b16 %v224, %v220
    %v281 = vpack.c.b16 %v225, %v221
    %v282 = vpack.c.b16 %v226, %v222
    %v283 = vpack.c.b16 %v227, %v223
    %v284 = vpack.c.b16 %v232, %v228
    %v285 = vpack.c.b16 %v233, %v229
    %v286 = vpack.c.b16 %v234, %v230
    %v287 = vpack.c.b16 %v235, %v231
    %v288 = vpack.c.b16 %v240, %v236
    %v289 = vpack.c.b16 %v241, %v237
    %v290 = vpack.c.b16 %v242, %v238
    %v291 = vpack.c.b16 %v243, %v239
    %v292 = vpack.c.b16 %v248, %v244
    %v293 = vpack.c.b16 %v249, %v245
    %v294 = vpack.c.b16 %v250, %v246
    %v295 = vpack.c.b16 %v251, %v247
    %v296 = vpack.c.b16 %v256, %v252
    %v297 = vpack.c.b16 %v257, %v253
    %v298 = vpack.c.b16 %v258, %v254
    %v299 = vpack.c.b16 %v259, %v255
    %v300 = vpack.c.b16 %v264, %v260
    %v301 = vpack.c.b16 %v265, %v261
    %v302 = vpack.c.b16 %v266, %v262
    %v303 = vpack.c.b16 %v267, %v263
    %v304 = vpack.c.b16 %v272, %v268
    %v305 = vpack.c.b16 %v273, %v269
    %v306 = vpack.c.b16 %v274, %v270
    %v307 = vpack.c.b16 %v275, %v271
    %340 = vmatprep.subr.bf16.mxu0 %v277
    %341 = vmatpush1.bf16.msra.mxu0 %v276
    %342 = vmatprep.subr.bf16.mxu0 %v281
    %343 = vmatpush1.bf16.msra.mxu0 %v280
    %344 = vmatprep.subr.bf16.mxu0 %v285
    %345 = vmatpush1.bf16.msra.mxu0 %v284
    %346 = vmatprep.subr.bf16.mxu0 %v289
    %347 = vmatpush1.bf16.msra.mxu0 %v288
    %348 = vmatprep.subr.bf16.mxu0 %v293
    %349 = vmatpush1.bf16.msra.mxu0 %v292
    %350 = vmatprep.subr.bf16.mxu0 %v297
    %351 = vmatpush1.bf16.msra.mxu0 %v296
    %352 = vmatprep.subr.bf16.mxu0 %v301
    %353 = vmatpush1.bf16.msra.mxu0 %v300
    %354 = vmatprep.subr.bf16.mxu0 %v305
    %355 = vmatpush1.bf16.msra.mxu0 %v304
    %356 = vmatprep.subr.bf16.mxu0 0
    %357 = vmatpush1.bf16.msra.mxu0 0
    %358 = vmatprep.subr.bf16.mxu0 0
    %359 = vmatpush1.bf16.msra.mxu0 0
    %360 = vmatprep.subr.bf16.mxu0 0
    %361 = vmatpush1.bf16.msra.mxu0 0
    %362 = vmatprep.subr.bf16.mxu0 0
    %363 = vmatpush1.bf16.msra.mxu0 0
    %364 = vmatprep.subr.bf16.mxu0 0
    %365 = vmatpush1.bf16.msra.mxu0 0
    %366 = vmatprep.subr.bf16.mxu0 0
    %367 = vmatpush1.bf16.msra.mxu0 0
    %368 = vmatprep.subr.bf16.mxu0 0
    %369 = vmatpush1.bf16.msra.mxu0 0
    %370 = vmatprep.subr.bf16.mxu0 0
    %371 = vmatpush1.bf16.msra.mxu0 0
    %372 = vmatprep.mubr.bf16.mxu0 0
    %373 = vmatmul.mubr.bf16.gmra.mrb[0].mxu0 %v122
    %v374 = vpop.f32.mrb[0].mxu0
    %v375 = vadd.f32 %v163, %v374
    %v376 = vpop.f32.mrb[0].mxu0
    %v377 = vadd.f32 %v167, %v376
    %v378 = vpop.f32.mrb[0].mxu0
    %v379 = vadd.f32 %v163, %v378
    %v380 = vpop.f32.mrb[0].mxu0
    %v381 = vadd.f32 %v167, %v380
    %382 = vmatprep.mubr.bf16.mxu0 0
    %383 = vmatmul.mubr.bf16.gmra.mrb[0].mxu0 %v123
    %v384 = vpop.f32.mrb[0].mxu0
    %v385 = vadd.f32 %v163, %v384
    %v386 = vpop.f32.mrb[0].mxu0
    %v387 = vadd.f32 %v167, %v386
    %v388 = vpop.f32.mrb[0].mxu0
    %v389 = vadd.f32 %v163, %v388
    %v390 = vpop.f32.mrb[0].mxu0
    %v391 = vadd.f32 %v167, %v390
    %392 = vmatprep.mubr.bf16.mxu0 0
    %393 = vmatmul.mubr.bf16.gmra.mrb[0].mxu0 %v124
    %v394 = vpop.f32.mrb[0].mxu0
    %v395 = vadd.f32 %v163, %v394
    %v396 = vpop.f32.mrb[0].mxu0
    %v397 = vadd.f32 %v167, %v396
    %v398 = vpop.f32.mrb[0].mxu0
    %v399 = vadd.f32 %v163, %v398
    %v400 = vpop.f32.mrb[0].mxu0
    %v401 = vadd.f32 %v167, %v400
    %402 = vmatprep.mubr.bf16.mxu0 0
    %403 = vmatmul.mubr.bf16.gmra.mrb[0].mxu0 %v125
    %v404 = vpop.f32.mrb[0].mxu0
    %v405 = vadd.f32 %v163, %v404
    %v406 = vpop.f32.mrb[0].mxu0
    %v407 = vadd.f32 %v167, %v406
    %v408 = vpop.f32.mrb[0].mxu0
    %v409 = vadd.f32 %v163, %v408
    %v410 = vpop.f32.mrb[0].mxu0
    %v411 = vadd.f32 %v167, %v410
    %412 = vdwg.mxu0
    %413 = vmatprep.subr.bf16.mxu0 %v279
    %414 = vmatpush1.bf16.msra.mxu0 %v278
    %415 = vmatprep.subr.bf16.mxu0 %v283
    %416 = vmatpush1.bf16.msra.mxu0 %v282
    %417 = vmatprep.subr.bf16.mxu0 %v287
    %418 = vmatpush1.bf16.msra.mxu0 %v286
    %419 = vmatprep.subr.bf16.mxu0 %v291
    %420 = vmatpush1.bf16.msra.mxu0 %v290
    %421 = vmatprep.subr.bf16.mxu0 %v295
    %422 = vmatpush1.bf16.msra.mxu0 %v294
    %423 = vmatprep.subr.bf16.mxu0 %v299
    %424 = vmatpush1.bf16.msra.mxu0 %v298
    %425 = vmatprep.subr.bf16.mxu0 %v303
    %426 = vmatpush1.bf16.msra.mxu0 %v302
    %427 = vmatprep.subr.bf16.mxu0 %v307
    %428 = vmatpush1.bf16.msra.mxu0 %v306
    %429 = vmatprep.subr.bf16.mxu0 0
    %430 = vmatpush1.bf16.msra.mxu0 0
    %431 = vmatprep.subr.bf16.mxu0 0
    %432 = vmatpush1.bf16.msra.mxu0 0
    %433 = vmatprep.subr.bf16.mxu0 0
    %434 = vmatpush1.bf16.msra.mxu0 0
    %435 = vmatprep.subr.bf16.mxu0 0
    %436 = vmatpush1.bf16.msra.mxu0 0
    %437 = vmatprep.subr.bf16.mxu0 0
    %438 = vmatpush1.bf16.msra.mxu0 0
    %439 = vmatprep.subr.bf16.mxu0 0
    %440 = vmatpush1.bf16.msra.mxu0 0
    %441 = vmatprep.subr.bf16.mxu0 0
    %442 = vmatpush1.bf16.msra.mxu0 0
    %443 = vmatprep.subr.bf16.mxu0 0
    %444 = vmatpush1.bf16.msra.mxu0 0
    %445 = vmatprep.mubr.bf16.mxu0 0
    %446 = vmatmul.mubr.bf16.gmra.mrb[0].mxu0 %v122
    %v447 = vpop.f32.mrb[0].mxu0
    %v448 = vadd.f32 %v171, %v447
    %v449 = vpop.f32.mrb[0].mxu0
    %v450 = vadd.f32 %v175, %v449
    %v451 = vpop.f32.mrb[0].mxu0
    %v452 = vadd.f32 %v171, %v451
    %v453 = vpop.f32.mrb[0].mxu0
    %v454 = vadd.f32 %v175, %v453
    %455 = vmatprep.mubr.bf16.mxu0 0
    %456 = vmatmul.mubr.bf16.gmra.mrb[0].mxu0 %v123
    %v457 = vpop.f32.mrb[0].mxu0
    %v458 = vadd.f32 %v171, %v457
    %v459 = vpop.f32.mrb[0].mxu0
    %v460 = vadd.f32 %v175, %v459
    %v461 = vpop.f32.mrb[0].mxu0
    %v462 = vadd.f32 %v171, %v461
    %v463 = vpop.f32.mrb[0].mxu0
    %v464 = vadd.f32 %v175, %v463
    %465 = vmatprep.mubr.bf16.mxu0 0
    %466 = vmatmul.mubr.bf16.gmra.mrb[0].mxu0 %v124
    %v467 = vpop.f32.mrb[0].mxu0
    %v468 = vadd.f32 %v171, %v467
    %v469 = vpop.f32.mrb[0].mxu0
    %v470 = vadd.f32 %v175, %v469
    %v471 = vpop.f32.mrb[0].mxu0
    %v472 = vadd.f32 %v171, %v471
    %v473 = vpop.f32.mrb[0].mxu0
    %v474 = vadd.f32 %v175, %v473
    %475 = vmatprep.mubr.bf16.mxu0 0
    %476 = vmatmul.mubr.bf16.gmra.mrb[0].mxu0 %v125
    %v477 = vpop.f32.mrb[0].mxu0
    %v478 = vadd.f32 %v171, %v477
    %v479 = vpop.f32.mrb[0].mxu0
    %v480 = vadd.f32 %v175, %v479
    %v481 = vpop.f32.mrb[0].mxu0
    %v482 = vadd.f32 %v171, %v481
    %v483 = vpop.f32.mrb[0].mxu0
    %v484 = vadd.f32 %v175, %v483
    %485 = vdwg.mxu0
    %486 = vst [vmem:[#allocation2] sm:$0xff] %v375
    %487 = vst [vmem:[#allocation2 + $0x8] sm:$0xff] %v377
    %488 = vst [vmem:[#allocation2 + $0x10] sm:$0xff] %v448
    %489 = vst [vmem:[#allocation2 + $0x18] sm:$0xff] %v450
    %490 = vst [vmem:[#allocation2 + $0x20] sm:$0xff] %v379
    %491 = vst [vmem:[#allocation2 + $0x28] sm:$0xff] %v381
    %492 = vst [vmem:[#allocation2 + $0x30] sm:$0xff] %v452
    %493 = vst [vmem:[#allocation2 + $0x38] sm:$0xff] %v454
    %494 = vst [vmem:[#allocation2 + $0x40] sm:$0xff] %v385
    %495 = vst [vmem:[#allocation2 + $0x48] sm:$0xff] %v387
    %496 = vst [vmem:[#allocation2 + $0x50] sm:$0xff] %v458
    %497 = vst [vmem:[#allocation2 + $0x58] sm:$0xff] %v460
    %498 = vst [vmem:[#allocation2 + $0x60] sm:$0xff] %v389
    %499 = vst [vmem:[#allocation2 + $0x68] sm:$0xff] %v391
    %500 = vst [vmem:[#allocation2 + $0x70] sm:$0xff] %v462
    %501 = vst [vmem:[#allocation2 + $0x78] sm:$0xff] %v464
    %502 = vst [vmem:[#allocation2 + $0x80] sm:$0xff] %v395
    %503 = vst [vmem:[#allocation2 + $0x88] sm:$0xff] %v397
    %504 = vst [vmem:[#allocation2 + $0x90] sm:$0xff] %v468
    %505 = vst [vmem:[#allocation2 + $0x98] sm:$0xff] %v470
    %506 = vst [vmem:[#allocation2 + $0xa0] sm:$0xff] %v399
    %507 = vst [vmem:[#allocation2 + $0xa8] sm:$0xff] %v401
    %508 = vst [vmem:[#allocation2 + $0xb0] sm:$0xff] %v472
    %509 = vst [vmem:[#allocation2 + $0xb8] sm:$0xff] %v474
    %510 = vst [vmem:[#allocation2 + $0xc0] sm:$0xff] %v405
    %511 = vst [vmem:[#allocation2 + $0xc8] sm:$0xff] %v407
    %512 = vst [vmem:[#allocation2 + $0xd0] sm:$0xff] %v478
    %513 = vst [vmem:[#allocation2 + $0xd8] sm:$0xff] %v480
    %514 = vst [vmem:[#allocation2 + $0xe0] sm:$0xff] %v409
    %515 = vst [vmem:[#allocation2 + $0xe8] sm:$0xff] %v411
    %516 = vst [vmem:[#allocation2 + $0xf0] sm:$0xff] %v482
    %517 = vst [vmem:[#allocation2 + $0xf8] sm:$0xff] %v484
    %v518 = vld [vmem:[%s4] sm:$0xff]
    %v519 = vld [vmem:[%s5] sm:$0xff]
    %v520 = vld [vmem:[#allocation2] sm:$0xff]
    %v521 = vld [vmem:[#allocation2 + $0x8] sm:$0xff]
    %v522 = vld [vmem:[#allocation2 + $0x10] sm:$0xff]
    %v523 = vld [vmem:[#allocation2 + $0x18] sm:$0xff]
    %v524 = vpack.c.bf16 %v518, %v518
    %v525 = vld [vmem:[#allocation7] sm:$0xff]
    %v526 = vld [vmem:[#allocation7 + $0x8] sm:$0xff]
    %v527 = vld [vmem:[#allocation7 + $0x10] sm:$0xff]
    %v528 = vld [vmem:[#allocation7 + $0x18] sm:$0xff]
    %v529 = vld [vmem:[#allocation7 + $0x20] sm:$0xff]
    %v530 = vld [vmem:[#allocation7 + $0x28] sm:$0xff]
    %v531 = vld [vmem:[#allocation7 + $0x30] sm:$0xff]
    %v532 = vld [vmem:[#allocation7 + $0x38] sm:$0xff]
    %v533 = vld [vmem:[#allocation7 + $0x40] sm:$0xff]
    %v534 = vld [vmem:[#allocation7 + $0x48] sm:$0xff]
    %v535 = vld [vmem:[#allocation7 + $0x50] sm:$0xff]
    %v536 = vld [vmem:[#allocation7 + $0x58] sm:$0xff]
    %v537 = vld [vmem:[#allocation7 + $0x60] sm:$0xff]
    %v538 = vld [vmem:[#allocation7 + $0x68] sm:$0xff]
    %v539 = vld [vmem:[#allocation7 + $0x70] sm:$0xff]
    %v540 = vld [vmem:[#allocation7 + $0x78] sm:$0xff]
    %v541 = vld [vmem:[#allocation7 + $0x80] sm:$0xff]
    %v542 = vld [vmem:[#allocation7 + $0x88] sm:$0xff]
    %v543 = vld [vmem:[#allocation7 + $0x90] sm:$0xff]
    %v544 = vld [vmem:[#allocation7 + $0x98] sm:$0xff]
    %v545 = vld [vmem:[#allocation7 + $0xa0] sm:$0xff]
    %v546 = vld [vmem:[#allocation7 + $0xa8] sm:$0xff]
    %v547 = vld [vmem:[#allocation7 + $0xb0] sm:$0xff]
    %v548 = vld [vmem:[#allocation7 + $0xb8] sm:$0xff]
    %v549 = vld [vmem:[#allocation7 + $0xc0] sm:$0xff]
    %v550 = vld [vmem:[#allocation7 + $0xc8] sm:$0xff]
    %v551 = vld [vmem:[#allocation7 + $0xd0] sm:$0xff]
    %v552 = vld [vmem:[#allocation7 + $0xd8] sm:$0xff]
    %v553 = vld [vmem:[#allocation7 + $0xe0] sm:$0xff]
    %v554 = vld [vmem:[#allocation7 + $0xe8] sm:$0xff]
    %v555 = vld [vmem:[#allocation7 + $0xf0] sm:$0xff]
    %v556 = vld [vmem:[#allocation7 + $0xf8] sm:$0xff]
    %v589 = vunpack.c.l.b16 %v525
    %v590 = vunpack.c.h.b16 %v525
    %v591 = vunpack.c.l.b16 %v526
    %v592 = vunpack.c.h.b16 %v526
    %v593 = vunpack.c.l.b16 %v527
    %v594 = vunpack.c.h.b16 %v527
    %v595 = vunpack.c.l.b16 %v528
    %v596 = vunpack.c.h.b16 %v528
    %v597 = vunpack.c.l.b16 %v529
    %v598 = vunpack.c.h.b16 %v529
    %v599 = vunpack.c.l.b16 %v530
    %v600 = vunpack.c.h.b16 %v530
    %v601 = vunpack.c.l.b16 %v531
    %v602 = vunpack.c.h.b16 %v531
    %v603 = vunpack.c.l.b16 %v532
    %v604 = vunpack.c.h.b16 %v532
    %v605 = vunpack.c.l.b16 %v533
    %v606 = vunpack.c.h.b16 %v533
    %v607 = vunpack.c.l.b16 %v534
    %v608 = vunpack.c.h.b16 %v534
    %v609 = vunpack.c.l.b16 %v535
    %v610 = vunpack.c.h.b16 %v535
    %v611 = vunpack.c.l.b16 %v536
    %v612 = vunpack.c.h.b16 %v536
    %v613 = vunpack.c.l.b16 %v537
    %v614 = vunpack.c.h.b16 %v537
    %v615 = vunpack.c.l.b16 %v538
    %v616 = vunpack.c.h.b16 %v538
    %v617 = vunpack.c.l.b16 %v539
    %v618 = vunpack.c.h.b16 %v539
    %v619 = vunpack.c.l.b16 %v540
    %v620 = vunpack.c.h.b16 %v540
    %v621 = vunpack.c.l.b16 %v541
    %v622 = vunpack.c.h.b16 %v541
    %v623 = vunpack.c.l.b16 %v542
    %v624 = vunpack.c.h.b16 %v542
    %v625 = vunpack.c.l.b16 %v543
    %v626 = vunpack.c.h.b16 %v543
    %v627 = vunpack.c.l.b16 %v544
    %v628 = vunpack.c.h.b16 %v544
    %v629 = vunpack.c.l.b16 %v545
    %v630 = vunpack.c.h.b16 %v545
    %v631 = vunpack.c.l.b16 %v546
    %v632 = vunpack.c.h.b16 %v546
    %v633 = vunpack.c.l.b16 %v547
    %v634 = vunpack.c.h.b16 %v547
    %v635 = vunpack.c.l.b16 %v548
    %v636 = vunpack.c.h.b16 %v548
    %v637 = vunpack.c.l.b16 %v549
    %v638 = vunpack.c.h.b16 %v549
    %v639 = vunpack.c.l.b16 %v550
    %v640 = vunpack.c.h.b16 %v550
    %v641 = vunpack.c.l.b16 %v551
    %v642 = vunpack.c.h.b16 %v551
    %v643 = vunpack.c.l.b16 %v552
    %v644 = vunpack.c.h.b16 %v552
    %v645 = vunpack.c.l.b16 %v553
    %v646 = vunpack.c.h.b16 %v553
    %v647 = vunpack.c.l.b16 %v554
    %v648 = vunpack.c.h.b16 %v554
    %v649 = vunpack.c.l.b16 %v555
    %v650 = vunpack.c.h.b16 %v555
    %v651 = vunpack.c.l.b16 %v556
    %v652 = vunpack.c.h.b16 %v556
    %v653 = vpack.c.b16 %v593, %v589
    %v654 = vpack.c.b16 %v594, %v590
    %v655 = vpack.c.b16 %v595, %v591
    %v656 = vpack.c.b16 %v596, %v592
    %v657 = vpack.c.b16 %v601, %v597
    %v658 = vpack.c.b16 %v602, %v598
    %v659 = vpack.c.b16 %v603, %v599
    %v660 = vpack.c.b16 %v604, %v600
    %v661 = vpack.c.b16 %v609, %v605
    %v662 = vpack.c.b16 %v610, %v606
    %v663 = vpack.c.b16 %v611, %v607
    %v664 = vpack.c.b16 %v612, %v608
    %v665 = vpack.c.b16 %v617, %v613
    %v666 = vpack.c.b16 %v618, %v614
    %v667 = vpack.c.b16 %v619, %v615
    %v668 = vpack.c.b16 %v620, %v616
    %v669 = vpack.c.b16 %v625, %v621
    %v670 = vpack.c.b16 %v626, %v622
    %v671 = vpack.c.b16 %v627, %v623
    %v672 = vpack.c.b16 %v628, %v624
    %v673 = vpack.c.b16 %v633, %v629
    %v674 = vpack.c.b16 %v634, %v630
    %v675 = vpack.c.b16 %v635, %v631
    %v676 = vpack.c.b16 %v636, %v632
    %v677 = vpack.c.b16 %v641, %v637
    %v678 = vpack.c.b16 %v642, %v638
    %v679 = vpack.c.b16 %v643, %v639
    %v680 = vpack.c.b16 %v644, %v640
    %v681 = vpack.c.b16 %v649, %v645
    %v682 = vpack.c.b16 %v650, %v646
    %v683 = vpack.c.b16 %v651, %v647
    %v684 = vpack.c.b16 %v652, %v648
    %717 = vmatprep.subr.bf16.mxu0 %v654
    %718 = vmatpush1.bf16.msra.mxu0 %v653
    %719 = vmatprep.subr.bf16.mxu0 %v658
    %720 = vmatpush1.bf16.msra.mxu0 %v657
    %721 = vmatprep.subr.bf16.mxu0 %v662
    %722 = vmatpush1.bf16.msra.mxu0 %v661
    %723 = vmatprep.subr.bf16.mxu0 %v666
    %724 = vmatpush1.bf16.msra.mxu0 %v665
    %725 = vmatprep.subr.bf16.mxu0 %v670
    %726 = vmatpush1.bf16.msra.mxu0 %v669
    %727 = vmatprep.subr.bf16.mxu0 %v674
    %728 = vmatpush1.bf16.msra.mxu0 %v673
    %729 = vmatprep.subr.bf16.mxu0 %v678
    %730 = vmatpush1.bf16.msra.mxu0 %v677
    %731 = vmatprep.subr.bf16.mxu0 %v682
    %732 = vmatpush1.bf16.msra.mxu0 %v681
    %733 = vmatprep.subr.bf16.mxu0 0
    %734 = vmatpush1.bf16.msra.mxu0 0
    %735 = vmatprep.subr.bf16.mxu0 0
    %736 = vmatpush1.bf16.msra.mxu0 0
    %737 = vmatprep.subr.bf16.mxu0 0
    %738 = vmatpush1.bf16.msra.mxu0 0
    %739 = vmatprep.subr.bf16.mxu0 0
    %740 = vmatpush1.bf16.msra.mxu0 0
    %741 = vmatprep.subr.bf16.mxu0 0
    %742 = vmatpush1.bf16.msra.mxu0 0
    %743 = vmatprep.subr.bf16.mxu0 0
    %744 = vmatpush1.bf16.msra.mxu0 0
    %745 = vmatprep.subr.bf16.mxu0 0
    %746 = vmatpush1.bf16.msra.mxu0 0
    %747 = vmatprep.subr.bf16.mxu0 0
    %748 = vmatpush1.bf16.msra.mxu0 0
    %749 = vmatprep.mubr.bf16.mxu0 0
    %750 = vmatmul.mubr.bf16.gmra.mrb[0].mxu0 %v524
    %v751 = vpop.f32.mrb[0].mxu0
    %v752 = vadd.f32 0.0, %v751
    %v753 = vpop.f32.mrb[0].mxu0
    %v754 = vadd.f32 0.0, %v753
    %v755 = vpop.f32.mrb[0].mxu0
    %v756 = vpop.f32.mrb[0].mxu0
    %757 = vdwg.mxu0
    %758 = vmatprep.subr.bf16.mxu0 %v656
    %759 = vmatpush1.bf16.msra.mxu0 %v655
    %760 = vmatprep.subr.bf16.mxu0 %v660
    %761 = vmatpush1.bf16.msra.mxu0 %v659
    %762 = vmatprep.subr.bf16.mxu0 %v664
    %763 = vmatpush1.bf16.msra.mxu0 %v663
    %764 = vmatprep.subr.bf16.mxu0 %v668
    %765 = vmatpush1.bf16.msra.mxu0 %v667
    %766 = vmatprep.subr.bf16.mxu0 %v672
    %767 = vmatpush1.bf16.msra.mxu0 %v671
    %768 = vmatprep.subr.bf16.mxu0 %v676
    %769 = vmatpush1.bf16.msra.mxu0 %v675
    %770 = vmatprep.subr.bf16.mxu0 %v680
    %771 = vmatpush1.bf16.msra.mxu0 %v679
    %772 = vmatprep.subr.bf16.mxu0 %v684
    %773 = vmatpush1.bf16.msra.mxu0 %v683
    %774 = vmatprep.subr.bf16.mxu0 0
    %775 = vmatpush1.bf16.msra.mxu0 0
    %776 = vmatprep.subr.bf16.mxu0 0
    %777 = vmatpush1.bf16.msra.mxu0 0
    %778 = vmatprep.subr.bf16.mxu0 0
    %779 = vmatpush1.bf16.msra.mxu0 0
    %780 = vmatprep.subr.bf16.mxu0 0
    %781 = vmatpush1.bf16.msra.mxu0 0
    %782 = vmatprep.subr.bf16.mxu0 0
    %783 = vmatpush1.bf16.msra.mxu0 0
    %784 = vmatprep.subr.bf16.mxu0 0
    %785 = vmatpush1.bf16.msra.mxu0 0
    %786 = vmatprep.subr.bf16.mxu0 0
    %787 = vmatpush1.bf16.msra.mxu0 0
    %788 = vmatprep.subr.bf16.mxu0 0
    %789 = vmatpush1.bf16.msra.mxu0 0
    %790 = vmatprep.mubr.bf16.mxu0 0
    %791 = vmatmul.mubr.bf16.gmra.mrb[0].mxu0 %v524
    %v792 = vpop.f32.mrb[0].mxu0
    %v793 = vadd.f32 0.0, %v792
    %v794 = vpop.f32.mrb[0].mxu0
    %v795 = vadd.f32 0.0, %v794
    %v796 = vpop.f32.mrb[0].mxu0
    %v797 = vpop.f32.mrb[0].mxu0
    %798 = vdwg.mxu0
    %v799 = vadd.f32 %v520, %v752
    %v800 = vadd.f32 %v521, %v754
    %v801 = vadd.f32 %v522, %v793
    %v802 = vadd.f32 %v523, %v795
    %v803 = vxor.u32 %v799, 2147483648
    %v804 = vxor.u32 %v800, 2147483648
    %v805 = vxor.u32 %v801, 2147483648
    %v806 = vmul.f32 %v803, 1.442695
    %v807 = vpow.pop %v806
    %v808 = vmul.f32 %v804, 1.442695
    %v809 = vpow.pop %v808
    %v810 = vmul.f32 %v805, 1.442695
    %v811 = vpow.pop %v810
    %v812 = vadd.f32 %v807, 1.0
    %v813 = vadd.f32 %v809, 1.0
    %v814 = vadd.f32 %v811, 1.0
    %v815 = vrcp.pop %v812
    %v816 = vmul.f32 1.0, %v815
    %v817 = vrcp.pop %v813
    %v818 = vmul.f32 1.0, %v817
    %v819 = vrcp.pop %v814
    %v820 = vmul.f32 1.0, %v819
    %v821 = vtanh.pop %v802
    %v822 = vmul.f32 %v818, %v519
    %v823 = vmul.f32 %v816, %v821
    %v824 = vadd.f32 %v822, %v823
    %v825 = vtanh.pop %v824
    %v826 = vmul.f32 %v820, %v825
    %v827 = vld [vmem:[#allocation2 + $0x20] sm:$0xff]
    %v828 = vld [vmem:[#allocation2 + $0x28] sm:$0xff]
    %v829 = vld [vmem:[#allocation2 + $0x30] sm:$0xff]
    %v830 = vld [vmem:[#allocation2 + $0x38] sm:$0xff]
    %v831 = vpack.c.bf16 %v826, %v826
    %832 = vmatprep.subr.bf16.mxu0 %v654
    %833 = vmatpush1.bf16.msra.mxu0 %v653
    %834 = vmatprep.subr.bf16.mxu0 %v658
    %835 = vmatpush1.bf16.msra.mxu0 %v657
    %836 = vmatprep.subr.bf16.mxu0 %v662
    %837 = vmatpush1.bf16.msra.mxu0 %v661
    %838 = vmatprep.subr.bf16.mxu0 %v666
    %839 = vmatpush1.bf16.msra.mxu0 %v665
    %840 = vmatprep.subr.bf16.mxu0 %v670
    %841 = vmatpush1.bf16.msra.mxu0 %v669
    %842 = vmatprep.subr.bf16.mxu0 %v674
    %843 = vmatpush1.bf16.msra.mxu0 %v673
    %844 = vmatprep.subr.bf16.mxu0 %v678
    %845 = vmatpush1.bf16.msra.mxu0 %v677
    %846 = vmatprep.subr.bf16.mxu0 %v682
    %847 = vmatpush1.bf16.msra.mxu0 %v681
    %848 = vmatprep.subr.bf16.mxu0 0
    %849 = vmatpush1.bf16.msra.mxu0 0
    %850 = vmatprep.subr.bf16.mxu0 0
    %851 = vmatpush1.bf16.msra.mxu0 0
    %852 = vmatprep.subr.bf16.mxu0 0
    %853 = vmatpush1.bf16.msra.mxu0 0
    %854 = vmatprep.subr.bf16.mxu0 0
    %855 = vmatpush1.bf16.msra.mxu0 0
    %856 = vmatprep.subr.bf16.mxu0 0
    %857 = vmatpush1.bf16.msra.mxu0 0
    %858 = vmatprep.subr.bf16.mxu0 0
    %859 = vmatpush1.bf16.msra.mxu0 0
    %860 = vmatprep.subr.bf16.mxu0 0
    %861 = vmatpush1.bf16.msra.mxu0 0
    %862 = vmatprep.subr.bf16.mxu0 0
    %863 = vmatpush1.bf16.msra.mxu0 0
    %864 = vmatprep.mubr.bf16.mxu0 0
    %865 = vmatmul.mubr.bf16.gmra.mrb[0].mxu0 %v831
    %v866 = vpop.f32.mrb[0].mxu0
    %v867 = vadd.f32 0.0, %v866
    %v868 = vpop.f32.mrb[0].mxu0
    %v869 = vadd.f32 0.0, %v868
    %v870 = vpop.f32.mrb[0].mxu0
    %v871 = vpop.f32.mrb[0].mxu0
    %872 = vdwg.mxu0
    %873 = vmatprep.subr.bf16.mxu0 %v656
    %874 = vmatpush1.bf16.msra.mxu0 %v655
    %875 = vmatprep.subr.bf16.mxu0 %v660
    %876 = vmatpush1.bf16.msra.mxu0 %v659
    %877 = vmatprep.subr.bf16.mxu0 %v664
    %878 = vmatpush1.bf16.msra.mxu0 %v663
    %879 = vmatprep.subr.bf16.mxu0 %v668
    %880 = vmatpush1.bf16.msra.mxu0 %v667
    %881 = vmatprep.subr.bf16.mxu0 %v672
    %882 = vmatpush1.bf16.msra.mxu0 %v671
    %883 = vmatprep.subr.bf16.mxu0 %v676
    %884 = vmatpush1.bf16.msra.mxu0 %v675
    %885 = vmatprep.subr.bf16.mxu0 %v680
    %886 = vmatpush1.bf16.msra.mxu0 %v679
    %887 = vmatprep.subr.bf16.mxu0 %v684
    %888 = vmatpush1.bf16.msra.mxu0 %v683
    %889 = vmatprep.subr.bf16.mxu0 0
    %890 = vmatpush1.bf16.msra.mxu0 0
    %891 = vmatprep.subr.bf16.mxu0 0
    %892 = vmatpush1.bf16.msra.mxu0 0
    %893 = vmatprep.subr.bf16.mxu0 0
    %894 = vmatpush1.bf16.msra.mxu0 0
    %895 = vmatprep.subr.bf16.mxu0 0
    %896 = vmatpush1.bf16.msra.mxu0 0
    %897 = vmatprep.subr.bf16.mxu0 0
    %898 = vmatpush1.bf16.msra.mxu0 0
    %899 = vmatprep.subr.bf16.mxu0 0
    %900 = vmatpush1.bf16.msra.mxu0 0
    %901 = vmatprep.subr.bf16.mxu0 0
    %902 = vmatpush1.bf16.msra.mxu0 0
    %903 = vmatprep.subr.bf16.mxu0 0
    %904 = vmatpush1.bf16.msra.mxu0 0
    %905 = vmatprep.mubr.bf16.mxu0 0
    %906 = vmatmul.mubr.bf16.gmra.mrb[0].mxu0 %v831
    %v907 = vpop.f32.mrb[0].mxu0
    %v908 = vadd.f32 0.0, %v907
    %v909 = vpop.f32.mrb[0].mxu0
    %v910 = vadd.f32 0.0, %v909
    %v911 = vpop.f32.mrb[0].mxu0
    %v912 = vpop.f32.mrb[0].mxu0
    %913 = vdwg.mxu0
    %v914 = vadd.f32 %v827, %v867
    %v915 = vadd.f32 %v828, %v869
    %v916 = vadd.f32 %v829, %v908
    %v917 = vadd.f32 %v830, %v910
    %v918 = vxor.u32 %v914, 2147483648
    %v919 = vxor.u32 %v915, 2147483648
    %v920 = vxor.u32 %v916, 2147483648
    %v921 = vmul.f32 %v918, 1.442695
    %v922 = vpow.pop %v921
    %v923 = vmul.f32 %v919, 1.442695
    %v924 = vpow.pop %v923
    %v925 = vmul.f32 %v920, 1.442695
    %v926 = vpow.pop %v925
    %v927 = vadd.f32 %v922, 1.0
    %v928 = vadd.f32 %v924, 1.0
    %v929 = vadd.f32 %v926, 1.0
    %v930 = vrcp.pop %v927
    %v931 = vmul.f32 1.0, %v930
    %v932 = vrcp.pop %v928
    %v933 = vmul.f32 1.0, %v932
    %v934 = vrcp.pop %v929
    %v935 = vmul.f32 1.0, %v934
    %v936 = vtanh.pop %v917
    %v937 = vmul.f32 %v933, %v824
    %v938 = vmul.f32 %v931, %v936
    %v939 = vadd.f32 %v937, %v938
    %v940 = vtanh.pop %v939
    %v941 = vmul.f32 %v935, %v940
    %v942 = vld [vmem:[#allocation2 + $0x40] sm:$0xff]
    %v943 = vld [vmem:[#allocation2 + $0x48] sm:$0xff]
    %v944 = vld [vmem:[#allocation2 + $0x50] sm:$0xff]
    %v945 = vld [vmem:[#allocation2 + $0x58] sm:$0xff]
    %v946 = vpack.c.bf16 %v941, %v941
    %947 = vmatprep.subr.bf16.mxu0 %v654
    %948 = vmatpush1.bf16.msra.mxu0 %v653
    %949 = vmatprep.subr.bf16.mxu0 %v658
    %950 = vmatpush1.bf16.msra.mxu0 %v657
    %951 = vmatprep.subr.bf16.mxu0 %v662
    %952 = vmatpush1.bf16.msra.mxu0 %v661
    %953 = vmatprep.subr.bf16.mxu0 %v666
    %954 = vmatpush1.bf16.msra.mxu0 %v665
    %955 = vmatprep.subr.bf16.mxu0 %v670
    %956 = vmatpush1.bf16.msra.mxu0 %v669
    %957 = vmatprep.subr.bf16.mxu0 %v674
    %958 = vmatpush1.bf16.msra.mxu0 %v673
    %959 = vmatprep.subr.bf16.mxu0 %v678
    %960 = vmatpush1.bf16.msra.mxu0 %v677
    %961 = vmatprep.subr.bf16.mxu0 %v682
    %962 = vmatpush1.bf16.msra.mxu0 %v681
    %963 = vmatprep.subr.bf16.mxu0 0
    %964 = vmatpush1.bf16.msra.mxu0 0
    %965 = vmatprep.subr.bf16.mxu0 0
    %966 = vmatpush1.bf16.msra.mxu0 0
    %967 = vmatprep.subr.bf16.mxu0 0
    %968 = vmatpush1.bf16.msra.mxu0 0
    %969 = vmatprep.subr.bf16.mxu0 0
    %970 = vmatpush1.bf16.msra.mxu0 0
    %971 = vmatprep.subr.bf16.mxu0 0
    %972 = vmatpush1.bf16.msra.mxu0 0
    %973 = vmatprep.subr.bf16.mxu0 0
    %974 = vmatpush1.bf16.msra.mxu0 0
    %975 = vmatprep.subr.bf16.mxu0 0
    %976 = vmatpush1.bf16.msra.mxu0 0
    %977 = vmatprep.subr.bf16.mxu0 0
    %978 = vmatpush1.bf16.msra.mxu0 0
    %979 = vmatprep.mubr.bf16.mxu0 0
    %980 = vmatmul.mubr.bf16.gmra.mrb[0].mxu0 %v946
    %v981 = vpop.f32.mrb[0].mxu0
    %v982 = vadd.f32 0.0, %v981
    %v983 = vpop.f32.mrb[0].mxu0
    %v984 = vadd.f32 0.0, %v983
    %v985 = vpop.f32.mrb[0].mxu0
    %v986 = vpop.f32.mrb[0].mxu0
    %987 = vdwg.mxu0
    %988 = vmatprep.subr.bf16.mxu0 %v656
    %989 = vmatpush1.bf16.msra.mxu0 %v655
    %990 = vmatprep.subr.bf16.mxu0 %v660
    %991 = vmatpush1.bf16.msra.mxu0 %v659
    %992 = vmatprep.subr.bf16.mxu0 %v664
    %993 = vmatpush1.bf16.msra.mxu0 %v663
    %994 = vmatprep.subr.bf16.mxu0 %v668
    %995 = vmatpush1.bf16.msra.mxu0 %v667
    %996 = vmatprep.subr.bf16.mxu0 %v672
    %997 = vmatpush1.bf16.msra.mxu0 %v671
    %998 = vmatprep.subr.bf16.mxu0 %v676
    %999 = vmatpush1.bf16.msra.mxu0 %v675
    %1000 = vmatprep.subr.bf16.mxu0 %v680
    %1001 = vmatpush1.bf16.msra.mxu0 %v679
    %1002 = vmatprep.subr.bf16.mxu0 %v684
    %1003 = vmatpush1.bf16.msra.mxu0 %v683
    %1004 = vmatprep.subr.bf16.mxu0 0
    %1005 = vmatpush1.bf16.msra.mxu0 0
    %1006 = vmatprep.subr.bf16.mxu0 0
    %1007 = vmatpush1.bf16.msra.mxu0 0
    %1008 = vmatprep.subr.bf16.mxu0 0
    %1009 = vmatpush1.bf16.msra.mxu0 0
    %1010 = vmatprep.subr.bf16.mxu0 0
    %1011 = vmatpush1.bf16.msra.mxu0 0
    %1012 = vmatprep.subr.bf16.mxu0 0
    %1013 = vmatpush1.bf16.msra.mxu0 0
    %1014 = vmatprep.subr.bf16.mxu0 0
    %1015 = vmatpush1.bf16.msra.mxu0 0
    %1016 = vmatprep.subr.bf16.mxu0 0
    %1017 = vmatpush1.bf16.msra.mxu0 0
    %1018 = vmatprep.subr.bf16.mxu0 0
    %1019 = vmatpush1.bf16.msra.mxu0 0
    %1020 = vmatprep.mubr.bf16.mxu0 0
    %1021 = vmatmul.mubr.bf16.gmra.mrb[0].mxu0 %v946
    %v1022 = vpop.f32.mrb[0].mxu0
    %v1023 = vadd.f32 0.0, %v1022
    %v1024 = vpop.f32.mrb[0].mxu0
    %v1025 = vadd.f32 0.0, %v1024
    %v1026 = vpop.f32.mrb[0].mxu0
    %v1027 = vpop.f32.mrb[0].mxu0
    %1028 = vdwg.mxu0
    %v1029 = vadd.f32 %v942, %v982
    %v1030 = vadd.f32 %v943, %v984
    %v1031 = vadd.f32 %v944, %v1023
    %v1032 = vadd.f32 %v945, %v1025
    %v1033 = vxor.u32 %v1029, 2147483648
    %v1034 = vxor.u32 %v1030, 2147483648
    %v1035 = vxor.u32 %v1031, 2147483648
    %v1036 = vmul.f32 %v1033, 1.442695
    %v1037 = vpow.pop %v1036
    %v1038 = vmul.f32 %v1034, 1.442695
    %v1039 = vpow.pop %v1038
    %v1040 = vmul.f32 %v1035, 1.442695
    %v1041 = vpow.pop %v1040
    %v1042 = vadd.f32 %v1037, 1.0
    %v1043 = vadd.f32 %v1039, 1.0
    %v1044 = vadd.f32 %v1041, 1.0
    %v1045 = vrcp.pop %v1042
    %v1046 = vmul.f32 1.0, %v1045
    %v1047 = vrcp.pop %v1043
    %v1048 = vmul.f32 1.0, %v1047
    %v1049 = vrcp.pop %v1044
    %v1050 = vmul.f32 1.0, %v1049
    %v1051 = vtanh.pop %v1032
    %v1052 = vmul.f32 %v1048, %v939
    %v1053 = vmul.f32 %v1046, %v1051
    %v1054 = vadd.f32 %v1052, %v1053
    %v1055 = vtanh.pop %v1054
    %v1056 = vmul.f32 %v1050, %v1055
    %v1057 = vld [vmem:[#allocation2 + $0x60] sm:$0xff]
    %v1058 = vld [vmem:[#allocation2 + $0x68] sm:$0xff]
    %v1059 = vld [vmem:[#allocation2 + $0x70] sm:$0xff]
    %v1060 = vld [vmem:[#allocation2 + $0x78] sm:$0xff]
    %v1061 = vpack.c.bf16 %v1056, %v1056
    %1062 = vmatprep.subr.bf16.mxu0 %v654
    %1063 = vmatpush1.bf16.msra.mxu0 %v653
    %1064 = vmatprep.subr.bf16.mxu0 %v658
    %1065 = vmatpush1.bf16.msra.mxu0 %v657
    %1066 = vmatprep.subr.bf16.mxu0 %v662
    %1067 = vmatpush1.bf16.msra.mxu0 %v661
    %1068 = vmatprep.subr.bf16.mxu0 %v666
    %1069 = vmatpush1.bf16.msra.mxu0 %v665
    %1070 = vmatprep.subr.bf16.mxu0 %v670
    %1071 = vmatpush1.bf16.msra.mxu0 %v669
    %1072 = vmatprep.subr.bf16.mxu0 %v674
    %1073 = vmatpush1.bf16.msra.mxu0 %v673
    %1074 = vmatprep.subr.bf16.mxu0 %v678
    %1075 = vmatpush1.bf16.msra.mxu0 %v677
    %1076 = vmatprep.subr.bf16.mxu0 %v682
    %1077 = vmatpush1.bf16.msra.mxu0 %v681
    %1078 = vmatprep.subr.bf16.mxu0 0
    %1079 = vmatpush1.bf16.msra.mxu0 0
    %1080 = vmatprep.subr.bf16.mxu0 0
    %1081 = vmatpush1.bf16.msra.mxu0 0
    %1082 = vmatprep.subr.bf16.mxu0 0
    %1083 = vmatpush1.bf16.msra.mxu0 0
    %1084 = vmatprep.subr.bf16.mxu0 0
    %1085 = vmatpush1.bf16.msra.mxu0 0
    %1086 = vmatprep.subr.bf16.mxu0 0
    %1087 = vmatpush1.bf16.msra.mxu0 0
    %1088 = vmatprep.subr.bf16.mxu0 0
    %1089 = vmatpush1.bf16.msra.mxu0 0
    %1090 = vmatprep.subr.bf16.mxu0 0
    %1091 = vmatpush1.bf16.msra.mxu0 0
    %1092 = vmatprep.subr.bf16.mxu0 0
    %1093 = vmatpush1.bf16.msra.mxu0 0
    %1094 = vmatprep.mubr.bf16.mxu0 0
    %1095 = vmatmul.mubr.bf16.gmra.mrb[0].mxu0 %v1061
    %v1096 = vpop.f32.mrb[0].mxu0
    %v1097 = vadd.f32 0.0, %v1096
    %v1098 = vpop.f32.mrb[0].mxu0
    %v1099 = vadd.f32 0.0, %v1098
    %v1100 = vpop.f32.mrb[0].mxu0
    %v1101 = vpop.f32.mrb[0].mxu0
    %1102 = vdwg.mxu0
    %1103 = vmatprep.subr.bf16.mxu0 %v656
    %1104 = vmatpush1.bf16.msra.mxu0 %v655
    %1105 = vmatprep.subr.bf16.mxu0 %v660
    %1106 = vmatpush1.bf16.msra.mxu0 %v659
    %1107 = vmatprep.subr.bf16.mxu0 %v664
    %1108 = vmatpush1.bf16.msra.mxu0 %v663
    %1109 = vmatprep.subr.bf16.mxu0 %v668
    %1110 = vmatpush1.bf16.msra.mxu0 %v667
    %1111 = vmatprep.subr.bf16.mxu0 %v672
    %1112 = vmatpush1.bf16.msra.mxu0 %v671
    %1113 = vmatprep.subr.bf16.mxu0 %v676
    %1114 = vmatpush1.bf16.msra.mxu0 %v675
    %1115 = vmatprep.subr.bf16.mxu0 %v680
    %1116 = vmatpush1.bf16.msra.mxu0 %v679
    %1117 = vmatprep.subr.bf16.mxu0 %v684
    %1118 = vmatpush1.bf16.msra.mxu0 %v683
    %1119 = vmatprep.subr.bf16.mxu0 0
    %1120 = vmatpush1.bf16.msra.mxu0 0
    %1121 = vmatprep.subr.bf16.mxu0 0
    %1122 = vmatpush1.bf16.msra.mxu0 0
    %1123 = vmatprep.subr.bf16.mxu0 0
    %1124 = vmatpush1.bf16.msra.mxu0 0
    %1125 = vmatprep.subr.bf16.mxu0 0
    %1126 = vmatpush1.bf16.msra.mxu0 0
    %1127 = vmatprep.subr.bf16.mxu0 0
    %1128 = vmatpush1.bf16.msra.mxu0 0
    %1129 = vmatprep.subr.bf16.mxu0 0
    %1130 = vmatpush1.bf16.msra.mxu0 0
    %1131 = vmatprep.subr.bf16.mxu0 0
    %1132 = vmatpush1.bf16.msra.mxu0 0
    %1133 = vmatprep.subr.bf16.mxu0 0
    %1134 = vmatpush1.bf16.msra.mxu0 0
    %1135 = vmatprep.mubr.bf16.mxu0 0
    %1136 = vmatmul.mubr.bf16.gmra.mrb[0].mxu0 %v1061
    %v1137 = vpop.f32.mrb[0].mxu0
    %v1138 = vadd.f32 0.0, %v1137
    %v1139 = vpop.f32.mrb[0].mxu0
    %v1140 = vadd.f32 0.0, %v1139
    %v1141 = vpop.f32.mrb[0].mxu0
    %v1142 = vpop.f32.mrb[0].mxu0
    %1143 = vdwg.mxu0
    %v1144 = vadd.f32 %v1057, %v1097
    %v1145 = vadd.f32 %v1058, %v1099
    %v1146 = vadd.f32 %v1059, %v1138
    %v1147 = vadd.f32 %v1060, %v1140
    %v1148 = vxor.u32 %v1144, 2147483648
    %v1149 = vxor.u32 %v1145, 2147483648
    %v1150 = vxor.u32 %v1146, 2147483648
    %v1151 = vmul.f32 %v1148, 1.442695
    %v1152 = vpow.pop %v1151
    %v1153 = vmul.f32 %v1149, 1.442695
    %v1154 = vpow.pop %v1153
    %v1155 = vmul.f32 %v1150, 1.442695
    %v1156 = vpow.pop %v1155
    %v1157 = vadd.f32 %v1152, 1.0
    %v1158 = vadd.f32 %v1154, 1.0
    %v1159 = vadd.f32 %v1156, 1.0
    %v1160 = vrcp.pop %v1157
    %v1161 = vmul.f32 1.0, %v1160
    %v1162 = vrcp.pop %v1158
    %v1163 = vmul.f32 1.0, %v1162
    %v1164 = vrcp.pop %v1159
    %v1165 = vmul.f32 1.0, %v1164
    %v1166 = vtanh.pop %v1147
    %v1167 = vmul.f32 %v1163, %v1054
    %v1168 = vmul.f32 %v1161, %v1166
    %v1169 = vadd.f32 %v1167, %v1168
    %v1170 = vtanh.pop %v1169
    %v1171 = vmul.f32 %v1165, %v1170
    %v1172 = vld [vmem:[#allocation2 + $0x80] sm:$0xff]
    %v1173 = vld [vmem:[#allocation2 + $0x88] sm:$0xff]
    %v1174 = vld [vmem:[#allocation2 + $0x90] sm:$0xff]
    %v1175 = vld [vmem:[#allocation2 + $0x98] sm:$0xff]
    %v1176 = vpack.c.bf16 %v1171, %v1171
    %1177 = vmatprep.subr.bf16.mxu0 %v654
    %1178 = vmatpush1.bf16.msra.mxu0 %v653
    %1179 = vmatprep.subr.bf16.mxu0 %v658
    %1180 = vmatpush1.bf16.msra.mxu0 %v657
    %1181 = vmatprep.subr.bf16.mxu0 %v662
    %1182 = vmatpush1.bf16.msra.mxu0 %v661
    %1183 = vmatprep.subr.bf16.mxu0 %v666
    %1184 = vmatpush1.bf16.msra.mxu0 %v665
    %1185 = vmatprep.subr.bf16.mxu0 %v670
    %1186 = vmatpush1.bf16.msra.mxu0 %v669
    %1187 = vmatprep.subr.bf16.mxu0 %v674
    %1188 = vmatpush1.bf16.msra.mxu0 %v673
    %1189 = vmatprep.subr.bf16.mxu0 %v678
    %1190 = vmatpush1.bf16.msra.mxu0 %v677
    %1191 = vmatprep.subr.bf16.mxu0 %v682
    %1192 = vmatpush1.bf16.msra.mxu0 %v681
    %1193 = vmatprep.subr.bf16.mxu0 0
    %1194 = vmatpush1.bf16.msra.mxu0 0
    %1195 = vmatprep.subr.bf16.mxu0 0
    %1196 = vmatpush1.bf16.msra.mxu0 0
    %1197 = vmatprep.subr.bf16.mxu0 0
    %1198 = vmatpush1.bf16.msra.mxu0 0
    %1199 = vmatprep.subr.bf16.mxu0 0
    %1200 = vmatpush1.bf16.msra.mxu0 0
    %1201 = vmatprep.subr.bf16.mxu0 0
    %1202 = vmatpush1.bf16.msra.mxu0 0
    %1203 = vmatprep.subr.bf16.mxu0 0
    %1204 = vmatpush1.bf16.msra.mxu0 0
    %1205 = vmatprep.subr.bf16.mxu0 0
    %1206 = vmatpush1.bf16.msra.mxu0 0
    %1207 = vmatprep.subr.bf16.mxu0 0
    %1208 = vmatpush1.bf16.msra.mxu0 0
    %1209 = vmatprep.mubr.bf16.mxu0 0
    %1210 = vmatmul.mubr.bf16.gmra.mrb[0].mxu0 %v1176
    %v1211 = vpop.f32.mrb[0].mxu0
    %v1212 = vadd.f32 0.0, %v1211
    %v1213 = vpop.f32.mrb[0].mxu0
    %v1214 = vadd.f32 0.0, %v1213
    %v1215 = vpop.f32.mrb[0].mxu0
    %v1216 = vpop.f32.mrb[0].mxu0
    %1217 = vdwg.mxu0
    %1218 = vmatprep.subr.bf16.mxu0 %v656
    %1219 = vmatpush1.bf16.msra.mxu0 %v655
    %1220 = vmatprep.subr.bf16.mxu0 %v660
    %1221 = vmatpush1.bf16.msra.mxu0 %v659
    %1222 = vmatprep.subr.bf16.mxu0 %v664
    %1223 = vmatpush1.bf16.msra.mxu0 %v663
    %1224 = vmatprep.subr.bf16.mxu0 %v668
    %1225 = vmatpush1.bf16.msra.mxu0 %v667
    %1226 = vmatprep.subr.bf16.mxu0 %v672
    %1227 = vmatpush1.bf16.msra.mxu0 %v671
    %1228 = vmatprep.subr.bf16.mxu0 %v676
    %1229 = vmatpush1.bf16.msra.mxu0 %v675
    %1230 = vmatprep.subr.bf16.mxu0 %v680
    %1231 = vmatpush1.bf16.msra.mxu0 %v679
    %1232 = vmatprep.subr.bf16.mxu0 %v684
    %1233 = vmatpush1.bf16.msra.mxu0 %v683
    %1234 = vmatprep.subr.bf16.mxu0 0
    %1235 = vmatpush1.bf16.msra.mxu0 0
    %1236 = vmatprep.subr.bf16.mxu0 0
    %1237 = vmatpush1.bf16.msra.mxu0 0
    %1238 = vmatprep.subr.bf16.mxu0 0
    %1239 = vmatpush1.bf16.msra.mxu0 0
    %1240 = vmatprep.subr.bf16.mxu0 0
    %1241 = vmatpush1.bf16.msra.mxu0 0
    %1242 = vmatprep.subr.bf16.mxu0 0
    %1243 = vmatpush1.bf16.msra.mxu0 0
    %1244 = vmatprep.subr.bf16.mxu0 0
    %1245 = vmatpush1.bf16.msra.mxu0 0
    %1246 = vmatprep.subr.bf16.mxu0 0
    %1247 = vmatpush1.bf16.msra.mxu0 0
    %1248 = vmatprep.subr.bf16.mxu0 0
    %1249 = vmatpush1.bf16.msra.mxu0 0
    %1250 = vmatprep.mubr.bf16.mxu0 0
    %1251 = vmatmul.mubr.bf16.gmra.mrb[0].mxu0 %v1176
    %v1252 = vpop.f32.mrb[0].mxu0
    %v1253 = vadd.f32 0.0, %v1252
    %v1254 = vpop.f32.mrb[0].mxu0
    %v1255 = vadd.f32 0.0, %v1254
    %v1256 = vpop.f32.mrb[0].mxu0
    %v1257 = vpop.f32.mrb[0].mxu0
    %1258 = vdwg.mxu0
    %v1259 = vadd.f32 %v1172, %v1212
    %v1260 = vadd.f32 %v1173, %v1214
    %v1261 = vadd.f32 %v1174, %v1253
    %v1262 = vadd.f32 %v1175, %v1255
    %v1263 = vxor.u32 %v1259, 2147483648
    %v1264 = vxor.u32 %v1260, 2147483648
    %v1265 = vxor.u32 %v1261, 2147483648
    %v1266 = vmul.f32 %v1263, 1.442695
    %v1267 = vpow.pop %v1266
    %v1268 = vmul.f32 %v1264, 1.442695
    %v1269 = vpow.pop %v1268
    %v1270 = vmul.f32 %v1265, 1.442695
    %v1271 = vpow.pop %v1270
    %v1272 = vadd.f32 %v1267, 1.0
    %v1273 = vadd.f32 %v1269, 1.0
    %v1274 = vadd.f32 %v1271, 1.0
    %v1275 = vrcp.pop %v1272
    %v1276 = vmul.f32 1.0, %v1275
    %v1277 = vrcp.pop %v1273
    %v1278 = vmul.f32 1.0, %v1277
    %v1279 = vrcp.pop %v1274
    %v1280 = vmul.f32 1.0, %v1279
    %v1281 = vtanh.pop %v1262
    %v1282 = vmul.f32 %v1278, %v1169
    %v1283 = vmul.f32 %v1276, %v1281
    %v1284 = vadd.f32 %v1282, %v1283
    %v1285 = vtanh.pop %v1284
    %v1286 = vmul.f32 %v1280, %v1285
    %v1287 = vld [vmem:[#allocation2 + $0xa0] sm:$0xff]
    %v1288 = vld [vmem:[#allocation2 + $0xa8] sm:$0xff]
    %v1289 = vld [vmem:[#allocation2 + $0xb0] sm:$0xff]
    %v1290 = vld [vmem:[#allocation2 + $0xb8] sm:$0xff]
    %v1291 = vpack.c.bf16 %v1286, %v1286
    %1292 = vmatprep.subr.bf16.mxu0 %v654
    %1293 = vmatpush1.bf16.msra.mxu0 %v653
    %1294 = vmatprep.subr.bf16.mxu0 %v658
    %1295 = vmatpush1.bf16.msra.mxu0 %v657
    %1296 = vmatprep.subr.bf16.mxu0 %v662
    %1297 = vmatpush1.bf16.msra.mxu0 %v661
    %1298 = vmatprep.subr.bf16.mxu0 %v666
    %1299 = vmatpush1.bf16.msra.mxu0 %v665
    %1300 = vmatprep.subr.bf16.mxu0 %v670
    %1301 = vmatpush1.bf16.msra.mxu0 %v669
    %1302 = vmatprep.subr.bf16.mxu0 %v674
    %1303 = vmatpush1.bf16.msra.mxu0 %v673
    %1304 = vmatprep.subr.bf16.mxu0 %v678
    %1305 = vmatpush1.bf16.msra.mxu0 %v677
    %1306 = vmatprep.subr.bf16.mxu0 %v682
    %1307 = vmatpush1.bf16.msra.mxu0 %v681
    %1308 = vmatprep.subr.bf16.mxu0 0
    %1309 = vmatpush1.bf16.msra.mxu0 0
    %1310 = vmatprep.subr.bf16.mxu0 0
    %1311 = vmatpush1.bf16.msra.mxu0 0
    %1312 = vmatprep.subr.bf16.mxu0 0
    %1313 = vmatpush1.bf16.msra.mxu0 0
    %1314 = vmatprep.subr.bf16.mxu0 0
    %1315 = vmatpush1.bf16.msra.mxu0 0
    %1316 = vmatprep.subr.bf16.mxu0 0
    %1317 = vmatpush1.bf16.msra.mxu0 0
    %1318 = vmatprep.subr.bf16.mxu0 0
    %1319 = vmatpush1.bf16.msra.mxu0 0
    %1320 = vmatprep.subr.bf16.mxu0 0
    %1321 = vmatpush1.bf16.msra.mxu0 0
    %1322 = vmatprep.subr.bf16.mxu0 0
    %1323 = vmatpush1.bf16.msra.mxu0 0
    %1324 = vmatprep.mubr.bf16.mxu0 0
    %1325 = vmatmul.mubr.bf16.gmra.mrb[0].mxu0 %v1291
    %v1326 = vpop.f32.mrb[0].mxu0
    %v1327 = vadd.f32 0.0, %v1326
    %v1328 = vpop.f32.mrb[0].mxu0
    %v1329 = vadd.f32 0.0, %v1328
    %v1330 = vpop.f32.mrb[0].mxu0
    %v1331 = vpop.f32.mrb[0].mxu0
    %1332 = vdwg.mxu0
    %1333 = vmatprep.subr.bf16.mxu0 %v656
    %1334 = vmatpush1.bf16.msra.mxu0 %v655
    %1335 = vmatprep.subr.bf16.mxu0 %v660
    %1336 = vmatpush1.bf16.msra.mxu0 %v659
    %1337 = vmatprep.subr.bf16.mxu0 %v664
    %1338 = vmatpush1.bf16.msra.mxu0 %v663
    %1339 = vmatprep.subr.bf16.mxu0 %v668
    %1340 = vmatpush1.bf16.msra.mxu0 %v667
    %1341 = vmatprep.subr.bf16.mxu0 %v672
    %1342 = vmatpush1.bf16.msra.mxu0 %v671
    %1343 = vmatprep.subr.bf16.mxu0 %v676
    %1344 = vmatpush1.bf16.msra.mxu0 %v675
    %1345 = vmatprep.subr.bf16.mxu0 %v680
    %1346 = vmatpush1.bf16.msra.mxu0 %v679
    %1347 = vmatprep.subr.bf16.mxu0 %v684
    %1348 = vmatpush1.bf16.msra.mxu0 %v683
    %1349 = vmatprep.subr.bf16.mxu0 0
    %1350 = vmatpush1.bf16.msra.mxu0 0
    %1351 = vmatprep.subr.bf16.mxu0 0
    %1352 = vmatpush1.bf16.msra.mxu0 0
    %1353 = vmatprep.subr.bf16.mxu0 0
    %1354 = vmatpush1.bf16.msra.mxu0 0
    %1355 = vmatprep.subr.bf16.mxu0 0
    %1356 = vmatpush1.bf16.msra.mxu0 0
    %1357 = vmatprep.subr.bf16.mxu0 0
    %1358 = vmatpush1.bf16.msra.mxu0 0
    %1359 = vmatprep.subr.bf16.mxu0 0
    %1360 = vmatpush1.bf16.msra.mxu0 0
    %1361 = vmatprep.subr.bf16.mxu0 0
    %1362 = vmatpush1.bf16.msra.mxu0 0
    %1363 = vmatprep.subr.bf16.mxu0 0
    %1364 = vmatpush1.bf16.msra.mxu0 0
    %1365 = vmatprep.mubr.bf16.mxu0 0
    %1366 = vmatmul.mubr.bf16.gmra.mrb[0].mxu0 %v1291
    %v1367 = vpop.f32.mrb[0].mxu0
    %v1368 = vadd.f32 0.0, %v1367
    %v1369 = vpop.f32.mrb[0].mxu0
    %v1370 = vadd.f32 0.0, %v1369
    %v1371 = vpop.f32.mrb[0].mxu0
    %v1372 = vpop.f32.mrb[0].mxu0
    %1373 = vdwg.mxu0
    %v1374 = vadd.f32 %v1287, %v1327
    %v1375 = vadd.f32 %v1288, %v1329
    %v1376 = vadd.f32 %v1289, %v1368
    %v1377 = vadd.f32 %v1290, %v1370
    %v1378 = vxor.u32 %v1374, 2147483648
    %v1379 = vxor.u32 %v1375, 2147483648
    %v1380 = vxor.u32 %v1376, 2147483648
    %v1381 = vmul.f32 %v1378, 1.442695
    %v1382 = vpow.pop %v1381
    %v1383 = vmul.f32 %v1379, 1.442695
    %v1384 = vpow.pop %v1383
    %v1385 = vmul.f32 %v1380, 1.442695
    %v1386 = vpow.pop %v1385
    %v1387 = vadd.f32 %v1382, 1.0
    %v1388 = vadd.f32 %v1384, 1.0
    %v1389 = vadd.f32 %v1386, 1.0
    %v1390 = vrcp.pop %v1387
    %v1391 = vmul.f32 1.0, %v1390
    %v1392 = vrcp.pop %v1388
    %v1393 = vmul.f32 1.0, %v1392
    %v1394 = vrcp.pop %v1389
    %v1395 = vmul.f32 1.0, %v1394
    %v1396 = vtanh.pop %v1377
    %v1397 = vmul.f32 %v1393, %v1284
    %v1398 = vmul.f32 %v1391, %v1396
    %v1399 = vadd.f32 %v1397, %v1398
    %v1400 = vtanh.pop %v1399
    %v1401 = vmul.f32 %v1395, %v1400
    %v1402 = vld [vmem:[#allocation2 + $0xc0] sm:$0xff]
    %v1403 = vld [vmem:[#allocation2 + $0xc8] sm:$0xff]
    %v1404 = vld [vmem:[#allocation2 + $0xd0] sm:$0xff]
    %v1405 = vld [vmem:[#allocation2 + $0xd8] sm:$0xff]
    %v1406 = vpack.c.bf16 %v1401, %v1401
    %1407 = vmatprep.subr.bf16.mxu0 %v654
    %1408 = vmatpush1.bf16.msra.mxu0 %v653
    %1409 = vmatprep.subr.bf16.mxu0 %v658
    %1410 = vmatpush1.bf16.msra.mxu0 %v657
    %1411 = vmatprep.subr.bf16.mxu0 %v662
    %1412 = vmatpush1.bf16.msra.mxu0 %v661
    %1413 = vmatprep.subr.bf16.mxu0 %v666
    %1414 = vmatpush1.bf16.msra.mxu0 %v665
    %1415 = vmatprep.subr.bf16.mxu0 %v670
    %1416 = vmatpush1.bf16.msra.mxu0 %v669
    %1417 = vmatprep.subr.bf16.mxu0 %v674
    %1418 = vmatpush1.bf16.msra.mxu0 %v673
    %1419 = vmatprep.subr.bf16.mxu0 %v678
    %1420 = vmatpush1.bf16.msra.mxu0 %v677
    %1421 = vmatprep.subr.bf16.mxu0 %v682
    %1422 = vmatpush1.bf16.msra.mxu0 %v681
    %1423 = vmatprep.subr.bf16.mxu0 0
    %1424 = vmatpush1.bf16.msra.mxu0 0
    %1425 = vmatprep.subr.bf16.mxu0 0
    %1426 = vmatpush1.bf16.msra.mxu0 0
    %1427 = vmatprep.subr.bf16.mxu0 0
    %1428 = vmatpush1.bf16.msra.mxu0 0
    %1429 = vmatprep.subr.bf16.mxu0 0
    %1430 = vmatpush1.bf16.msra.mxu0 0
    %1431 = vmatprep.subr.bf16.mxu0 0
    %1432 = vmatpush1.bf16.msra.mxu0 0
    %1433 = vmatprep.subr.bf16.mxu0 0
    %1434 = vmatpush1.bf16.msra.mxu0 0
    %1435 = vmatprep.subr.bf16.mxu0 0
    %1436 = vmatpush1.bf16.msra.mxu0 0
    %1437 = vmatprep.subr.bf16.mxu0 0
    %1438 = vmatpush1.bf16.msra.mxu0 0
    %1439 = vmatprep.mubr.bf16.mxu0 0
    %1440 = vmatmul.mubr.bf16.gmra.mrb[0].mxu0 %v1406
    %v1441 = vpop.f32.mrb[0].mxu0
    %v1442 = vadd.f32 0.0, %v1441
    %v1443 = vpop.f32.mrb[0].mxu0
    %v1444 = vadd.f32 0.0, %v1443
    %v1445 = vpop.f32.mrb[0].mxu0
    %v1446 = vpop.f32.mrb[0].mxu0
    %1447 = vdwg.mxu0
    %1448 = vmatprep.subr.bf16.mxu0 %v656
    %1449 = vmatpush1.bf16.msra.mxu0 %v655
    %1450 = vmatprep.subr.bf16.mxu0 %v660
    %1451 = vmatpush1.bf16.msra.mxu0 %v659
    %1452 = vmatprep.subr.bf16.mxu0 %v664
    %1453 = vmatpush1.bf16.msra.mxu0 %v663
    %1454 = vmatprep.subr.bf16.mxu0 %v668
    %1455 = vmatpush1.bf16.msra.mxu0 %v667
    %1456 = vmatprep.subr.bf16.mxu0 %v672
    %1457 = vmatpush1.bf16.msra.mxu0 %v671
    %1458 = vmatprep.subr.bf16.mxu0 %v676
    %1459 = vmatpush1.bf16.msra.mxu0 %v675
    %1460 = vmatprep.subr.bf16.mxu0 %v680
    %1461 = vmatpush1.bf16.msra.mxu0 %v679
    %1462 = vmatprep.subr.bf16.mxu0 %v684
    %1463 = vmatpush1.bf16.msra.mxu0 %v683
    %1464 = vmatprep.subr.bf16.mxu0 0
    %1465 = vmatpush1.bf16.msra.mxu0 0
    %1466 = vmatprep.subr.bf16.mxu0 0
    %1467 = vmatpush1.bf16.msra.mxu0 0
    %1468 = vmatprep.subr.bf16.mxu0 0
    %1469 = vmatpush1.bf16.msra.mxu0 0
    %1470 = vmatprep.subr.bf16.mxu0 0
    %1471 = vmatpush1.bf16.msra.mxu0 0
    %1472 = vmatprep.subr.bf16.mxu0 0
    %1473 = vmatpush1.bf16.msra.mxu0 0
    %1474 = vmatprep.subr.bf16.mxu0 0
    %1475 = vmatpush1.bf16.msra.mxu0 0
    %1476 = vmatprep.subr.bf16.mxu0 0
    %1477 = vmatpush1.bf16.msra.mxu0 0
    %1478 = vmatprep.subr.bf16.mxu0 0
    %1479 = vmatpush1.bf16.msra.mxu0 0
    %1480 = vmatprep.mubr.bf16.mxu0 0
    %1481 = vmatmul.mubr.bf16.gmra.mrb[0].mxu0 %v1406
    %v1482 = vpop.f32.mrb[0].mxu0
    %v1483 = vadd.f32 0.0, %v1482
    %v1484 = vpop.f32.mrb[0].mxu0
    %v1485 = vadd.f32 0.0, %v1484
    %v1486 = vpop.f32.mrb[0].mxu0
    %v1487 = vpop.f32.mrb[0].mxu0
    %1488 = vdwg.mxu0
    %v1489 = vadd.f32 %v1402, %v1442
    %v1490 = vadd.f32 %v1403, %v1444
    %v1491 = vadd.f32 %v1404, %v1483
    %v1492 = vadd.f32 %v1405, %v1485
    %v1493 = vxor.u32 %v1489, 2147483648
    %v1494 = vxor.u32 %v1490, 2147483648
    %v1495 = vxor.u32 %v1491, 2147483648
    %v1496 = vmul.f32 %v1493, 1.442695
    %v1497 = vpow.pop %v1496
    %v1498 = vmul.f32 %v1494, 1.442695
    %v1499 = vpow.pop %v1498
    %v1500 = vmul.f32 %v1495, 1.442695
    %v1501 = vpow.pop %v1500
    %v1502 = vadd.f32 %v1497, 1.0
    %v1503 = vadd.f32 %v1499, 1.0
    %v1504 = vadd.f32 %v1501, 1.0
    %v1505 = vrcp.pop %v1502
    %v1506 = vmul.f32 1.0, %v1505
    %v1507 = vrcp.pop %v1503
    %v1508 = vmul.f32 1.0, %v1507
    %v1509 = vrcp.pop %v1504
    %v1510 = vmul.f32 1.0, %v1509
    %v1511 = vtanh.pop %v1492
    %v1512 = vmul.f32 %v1508, %v1399
    %v1513 = vmul.f32 %v1506, %v1511
    %v1514 = vadd.f32 %v1512, %v1513
    %v1515 = vtanh.pop %v1514
    %v1516 = vmul.f32 %v1510, %v1515
    %v1517 = vld [vmem:[#allocation2 + $0xe0] sm:$0xff]
    %v1518 = vld [vmem:[#allocation2 + $0xe8] sm:$0xff]
    %v1519 = vld [vmem:[#allocation2 + $0xf0] sm:$0xff]
    %v1520 = vld [vmem:[#allocation2 + $0xf8] sm:$0xff]
    %v1521 = vpack.c.bf16 %v1516, %v1516
    %1522 = vmatprep.subr.bf16.mxu0 %v654
    %1523 = vmatpush1.bf16.msra.mxu0 %v653
    %1524 = vmatprep.subr.bf16.mxu0 %v658
    %1525 = vmatpush1.bf16.msra.mxu0 %v657
    %1526 = vmatprep.subr.bf16.mxu0 %v662
    %1527 = vmatpush1.bf16.msra.mxu0 %v661
    %1528 = vmatprep.subr.bf16.mxu0 %v666
    %1529 = vmatpush1.bf16.msra.mxu0 %v665
    %1530 = vmatprep.subr.bf16.mxu0 %v670
    %1531 = vmatpush1.bf16.msra.mxu0 %v669
    %1532 = vmatprep.subr.bf16.mxu0 %v674
    %1533 = vmatpush1.bf16.msra.mxu0 %v673
    %1534 = vmatprep.subr.bf16.mxu0 %v678
    %1535 = vmatpush1.bf16.msra.mxu0 %v677
    %1536 = vmatprep.subr.bf16.mxu0 %v682
    %1537 = vmatpush1.bf16.msra.mxu0 %v681
    %1538 = vmatprep.subr.bf16.mxu0 0
    %1539 = vmatpush1.bf16.msra.mxu0 0
    %1540 = vmatprep.subr.bf16.mxu0 0
    %1541 = vmatpush1.bf16.msra.mxu0 0
    %1542 = vmatprep.subr.bf16.mxu0 0
    %1543 = vmatpush1.bf16.msra.mxu0 0
    %1544 = vmatprep.subr.bf16.mxu0 0
    %1545 = vmatpush1.bf16.msra.mxu0 0
    %1546 = vmatprep.subr.bf16.mxu0 0
    %1547 = vmatpush1.bf16.msra.mxu0 0
    %1548 = vmatprep.subr.bf16.mxu0 0
    %1549 = vmatpush1.bf16.msra.mxu0 0
    %1550 = vmatprep.subr.bf16.mxu0 0
    %1551 = vmatpush1.bf16.msra.mxu0 0
    %1552 = vmatprep.subr.bf16.mxu0 0
    %1553 = vmatpush1.bf16.msra.mxu0 0
    %1554 = vmatprep.mubr.bf16.mxu0 0
    %1555 = vmatmul.mubr.bf16.gmra.mrb[0].mxu0 %v1521
    %v1556 = vpop.f32.mrb[0].mxu0
    %v1557 = vadd.f32 0.0, %v1556
    %v1558 = vpop.f32.mrb[0].mxu0
    %v1559 = vadd.f32 0.0, %v1558
    %v1560 = vpop.f32.mrb[0].mxu0
    %v1561 = vpop.f32.mrb[0].mxu0
    %1562 = vdwg.mxu0
    %1563 = vmatprep.subr.bf16.mxu0 %v656
    %1564 = vmatpush1.bf16.msra.mxu0 %v655
    %1565 = vmatprep.subr.bf16.mxu0 %v660
    %1566 = vmatpush1.bf16.msra.mxu0 %v659
    %1567 = vmatprep.subr.bf16.mxu0 %v664
    %1568 = vmatpush1.bf16.msra.mxu0 %v663
    %1569 = vmatprep.subr.bf16.mxu0 %v668
    %1570 = vmatpush1.bf16.msra.mxu0 %v667
    %1571 = vmatprep.subr.bf16.mxu0 %v672
    %1572 = vmatpush1.bf16.msra.mxu0 %v671
    %1573 = vmatprep.subr.bf16.mxu0 %v676
    %1574 = vmatpush1.bf16.msra.mxu0 %v675
    %1575 = vmatprep.subr.bf16.mxu0 %v680
    %1576 = vmatpush1.bf16.msra.mxu0 %v679
    %1577 = vmatprep.subr.bf16.mxu0 %v684
    %1578 = vmatpush1.bf16.msra.mxu0 %v683
    %1579 = vmatprep.subr.bf16.mxu0 0
    %1580 = vmatpush1.bf16.msra.mxu0 0
    %1581 = vmatprep.subr.bf16.mxu0 0
    %1582 = vmatpush1.bf16.msra.mxu0 0
    %1583 = vmatprep.subr.bf16.mxu0 0
    %1584 = vmatpush1.bf16.msra.mxu0 0
    %1585 = vmatprep.subr.bf16.mxu0 0
    %1586 = vmatpush1.bf16.msra.mxu0 0
    %1587 = vmatprep.subr.bf16.mxu0 0
    %1588 = vmatpush1.bf16.msra.mxu0 0
    %1589 = vmatprep.subr.bf16.mxu0 0
    %1590 = vmatpush1.bf16.msra.mxu0 0
    %1591 = vmatprep.subr.bf16.mxu0 0
    %1592 = vmatpush1.bf16.msra.mxu0 0
    %1593 = vmatprep.subr.bf16.mxu0 0
    %1594 = vmatpush1.bf16.msra.mxu0 0
    %1595 = vmatprep.mubr.bf16.mxu0 0
    %1596 = vmatmul.mubr.bf16.gmra.mrb[0].mxu0 %v1521
    %v1597 = vpop.f32.mrb[0].mxu0
    %v1598 = vadd.f32 0.0, %v1597
    %v1599 = vpop.f32.mrb[0].mxu0
    %v1600 = vadd.f32 0.0, %v1599
    %v1601 = vpop.f32.mrb[0].mxu0
    %v1602 = vpop.f32.mrb[0].mxu0
    %1603 = vdwg.mxu0
    %v1604 = vadd.f32 %v1517, %v1557
    %v1605 = vadd.f32 %v1518, %v1559
    %v1606 = vadd.f32 %v1519, %v1598
    %v1607 = vadd.f32 %v1520, %v1600
    %v1608 = vxor.u32 %v1604, 2147483648
    %v1609 = vxor.u32 %v1605, 2147483648
    %v1610 = vxor.u32 %v1606, 2147483648
    %v1611 = vmul.f32 %v1608, 1.442695
    %v1612 = vpow.pop %v1611
    %v1613 = vmul.f32 %v1609, 1.442695
    %v1614 = vpow.pop %v1613
    %v1615 = vmul.f32 %v1610, 1.442695
    %v1616 = vpow.pop %v1615
    %v1617 = vadd.f32 %v1612, 1.0
    %v1618 = vadd.f32 %v1614, 1.0
    %v1619 = vadd.f32 %v1616, 1.0
    %v1620 = vrcp.pop %v1617
    %v1621 = vmul.f32 1.0, %v1620
    %v1622 = vrcp.pop %v1618
    %v1623 = vmul.f32 1.0, %v1622
    %v1624 = vrcp.pop %v1619
    %v1625 = vmul.f32 1.0, %v1624
    %v1626 = vtanh.pop %v1607
    %v1627 = vmul.f32 %v1623, %v1514
    %v1628 = vmul.f32 %v1621, %v1626
    %v1629 = vadd.f32 %v1627, %v1628
    %v1630 = vtanh.pop %v1629
    %v1631 = vmul.f32 %v1625, %v1630
    %1632 = vst [vmem:[#allocation9] sm:$0xff] %v1631
    %1633 = vst [vmem:[#allocation10] sm:$0xff] %v1629
    %v1634 = vld [vmem:[%s6] sm:$0x1]
    %v1636 = vlaneseq
    %v1637 = vshrl.u32 %v1636, 7
    %v1638 = vsub.s32 0, %v1637
    %v1639 = vrot.slane %v1634, %v1638
    %v1641 = vmul.f32 %v1631, %v1639
    %1642 = vadd.xlane.f32.xlu0 %v1641
    %v1643 = vpop.xlane.xlu0 %1642
    %s1644 = sld [smem:[#allocation3]]
    %v1645 = vstv %s1644
    %v1646 = vadd.f32 %v1643, %v1645
    %v1647 = vxor.u32 %v1646, 2147483648
    %v1648 = vmul.f32 %v1647, 1.442695
    %v1649 = vpow.pop %v1648
    %v1650 = vadd.f32 %v1649, 1.0
    %v1651 = vrcp.pop %v1650
    %v1652 = vmul.f32 1.0, %v1651
    %vm1653 = vcmask 7168
    %1654 = vst.msk [vmem:[%s8] sm:$0xff] %vm1653, %v1652
    // Predicated region
    $region42: #{my_model_forward.1} parent=1 // pred_check
      _
    $region43: #{my_model_forward.1} parent=1 // pred_check_branch
      %1656 = sbr.rel (0) target = $region45
    $region44: #{my_model_forward.1} parent=1 // pred_region
      _
    $region45: #{my_model_forward.1} parent=1 // pred_fallthru
      _
    // Predicated region
    $region46: #{my_model_forward.1} parent=1 // pred_check
      _
    $region47: #{my_model_forward.1} parent=1 // pred_check_branch
      %1658 = sbr.rel (0) target = $region49
    $region48: #{my_model_forward.1} parent=1 // pred_region
      %s1660 = ssub.s32 128, 128
      %1661 = vsyncadd [#allocation6], %s1660
      %s1663 = sshll.u32 [#allocation9], 4
      %s1664 = int_to_ptr.vmem [resolvable:$true] %s1663
      %1666 = dma.vmem_to_hbm [thread:$0]  %s1664, 128, %s9, [#allocation6]
    $region49: #{my_model_forward.1} parent=1 // pred_fallthru
      _
    // Predicated region
    $region50: #{my_model_forward.1} parent=1 // pred_check
      _
    $region51: #{my_model_forward.1} parent=1 // pred_check_branch
      %1668 = sbr.rel (0) target = $region53
    $region52: #{my_model_forward.1} parent=1 // pred_region
      %s1670 = ssub.s32 128, 128
      %1671 = vsyncadd [#allocation11], %s1670
      %s1673 = sshll.u32 [#allocation10], 4
      %s1674 = int_to_ptr.vmem [resolvable:$true] %s1673
      %1676 = dma.vmem_to_hbm [thread:$0]  %s1674, 128, %s10, [#allocation11]
    $region53: #{my_model_forward.1} parent=1 // pred_fallthru
      _
    // Predicated region
    $region54: #{my_model_forward.1} parent=1 // pred_check
      _
    $region55: #{my_model_forward.1} parent=1 // pred_check_branch
      %1678 = sbr.rel (0) target = $region57
    $region56: #{my_model_forward.1} parent=1 // pred_region
      _
    $region57: #{my_model_forward.1} parent=1 // pred_fallthru
      _
    // Predicated region
    $region58: #{my_model_forward.1} parent=1 // pred_check
      _
    $region59: #{my_model_forward.1} parent=1 // pred_check_branch
      %1680 = sbr.rel (0) target = $region61
    $region60: #{my_model_forward.1} parent=1 // pred_region
      %1681 = dma.done [#allocation6], 128
    $region61: #{my_model_forward.1} parent=1 // pred_fallthru
      _
    // Predicated region
    $region62: #{my_model_forward.1} parent=1 // pred_check
      _
    $region63: #{my_model_forward.1} parent=1 // pred_check_branch
      %1683 = sbr.rel (0) target = $region65
    $region64: #{my_model_forward.1} parent=1 // pred_region
      %1684 = dma.done [#allocation11], 128
    $region65: #{my_model_forward.1} parent=1 // pred_fallthru
      _
    %1685 = vsyncpa [#allocation5], 1
    %1686 = vsyncpa [#allocation8], 1
    %1687 = vsyncpa [#allocation6], 1
    %1688 = vsyncpa [#allocation11], 1

</llo_original>
